<compile_context>
chip_gen: v7x
topology: tpu7x:2x2x1
jax: 0.10.0
libtpu: 0.0.40
codegen_flags: <defaults>
</compile_context>

<pallas_src>
import numpy as np

import jax
import jax.numpy as jnp
from jax.experimental import pallas as pl
from jax.experimental.pallas import tpu as pltpu


def _py_slice_bounds(start, stop, n):
    """Python/PyTorch `a[start:stop]` clamping semantics for a dim of size n."""
    start = max(n + start, 0) if start < 0 else min(start, n)
    stop = max(n + stop, 0) if stop < 0 else min(stop, n)
    return start, max(start, stop)


def _crop_bounds(h, w):
    crow = h // 2
    ccol = h // 2          # NOTE: the PyTorch module uses h//2 for BOTH axes.
    r0, r1 = _py_slice_bounds(crow - 50, crow + 50, h)
    c0, c1 = _py_slice_bounds(ccol - 50, ccol + 50, w)
    return r0, r1, c0, c1


def _dft_mats(n):
    """Real/imag parts of the n-point DFT matrix exp(-2*pi*i*j*k/n) (symmetric)."""
    idx = jnp.arange(n, dtype=jnp.float32)
    ang = (-2.0 * jnp.pi / n) * jnp.mod(jnp.outer(idx, idx), float(n))
    return jnp.cos(ang), jnp.sin(ang)


def _round_up(n, m):
    return ((n + m - 1) // m) * m


def _ca_kernel(x_ref, fhr_ref, fhi_ref, fwr_ref, fwi_ref,
               w1_ref, b1_ref, w2_ref, b2_ref, o_ref, are_ref, aim_ref):
    C, H, W = x_ref.shape
    Rcp = fhr_ref.shape[0]          # crop rows, padded to a multiple of 8
    Ccp = fwr_ref.shape[1]          # crop cols, padded to a multiple of 128

    fhr = fhr_ref[...]              # (Rcp, H): crop rows of F_H, scaled by 1/cnt
    fhi = fhi_ref[...]
    fwr = fwr_ref[...]              # (W, Ccp): crop cols of F_W (zero padded)
    fwi = fwi_ref[...]

    # --- stage 1: per-channel row DFT (Rcp,H)@(H,W); loop bounds live ranges ---
    @pl.loop(0, C)
    def _(c):
        xc = x_ref[c].astype(jnp.float32)                         # (H, W)
        are_ref[c] = jnp.dot(fhr, xc, preferred_element_type=jnp.float32)
        aim_ref[c] = jnp.dot(fhi, xc, preferred_element_type=jnp.float32)

    # --- stage 2: channel-batched column DFT, one big matmul per term ---
    a_re = are_ref[...].reshape(C * Rcp, W)       # free: Rcp % 8 == 0
    a_im = aim_ref[...].reshape(C * Rcp, W)
    m_re = (jnp.dot(a_re, fwr, preferred_element_type=jnp.float32)
            - jnp.dot(a_im, fwi, preferred_element_type=jnp.float32))
    m_im = (jnp.dot(a_re, fwi, preferred_element_type=jnp.float32)
            + jnp.dot(a_im, fwr, preferred_element_type=jnp.float32))
    mag = jnp.sqrt(m_re * m_re + m_im * m_im).reshape(C, Rcp, Ccp)

    # crop mean: 1/cnt already folded into fhr/fhi, zero padding contributes 0
    means = jnp.sum(jnp.sum(mag, axis=2), axis=1, keepdims=True)  # (C, 1)

    # --- channel-attention MLP (the two 1x1 convs) as two small dots ---
    h = jnp.maximum(
        jnp.dot(w1_ref[...], means, preferred_element_type=jnp.float32)
        + b1_ref[...], 0.0)                                       # (mid, 1)
    z = (jnp.dot(w2_ref[...], h, preferred_element_type=jnp.float32)
         + b2_ref[...])                                           # (C, 1)
    scale = 1.0 / (1.0 + jnp.exp(-z))                             # sigmoid

    # --- vectorized gate + single store ---
    o_ref[...] = (x_ref[...].astype(jnp.float32)
                  * scale.reshape(C, 1, 1)).astype(o_ref.dtype)


@jax.jit
def ca_layer(x, w1, b1, w2, b2):
    """CALayer.forward. x: (B,C,H,W); w1: (mid,C); b1: (mid,); w2: (C,mid); b2: (C,)."""
    B, C, H, W = x.shape
    mid = w1.shape[0]

    r0, r1, c0, c1 = _crop_bounds(H, W)
    rc, cc = r1 - r0, c1 - c0
    cnt = max(rc * cc, 1)
    rcp = max(_round_up(rc, 8), 8)          # sublane-aligned crop rows
    ccp = max(_round_up(cc, 128), 128)      # lane-dense crop cols

    # shifted-spectrum index -> original FFT index (fftshift permutation)
    rows = np.fft.fftshift(np.arange(H))[r0:r1]
    cols = np.fft.fftshift(np.arange(W))[c0:c1]

    fhr_f, fhi_f = _dft_mats(H)
    fwr_f, fwi_f = _dft_mats(W)
    inv_cnt = 1.0 / float(cnt)

    # crop-sliced (and mean-scaled) DFT factors, zero-padded to (rcp,·)/(·,ccp)
    fhr = jnp.zeros((rcp, H), jnp.float32).at[:rc, :].set(fhr_f[rows, :] * inv_cnt)
    fhi = jnp.zeros((rcp, H), jnp.float32).at[:rc, :].set(fhi_f[rows, :] * inv_cnt)
    fwr = jnp.zeros((W, ccp), jnp.float32).at[:, :cc].set(fwr_f[:, cols])
    fwi = jnp.zeros((W, ccp), jnp.float32).at[:, :cc].set(fwi_f[:, cols])

    w1m = w1.astype(jnp.float32)                       # (mid, C)
    b1c = b1.reshape(mid, 1).astype(jnp.float32)       # (mid, 1)
    w2m = w2.astype(jnp.float32)                       # (C, mid)
    b2c = b2.reshape(C, 1).astype(jnp.float32)         # (C, 1)

    blk = (pl.Squeezed(), C, H, W)
    bidx = lambda b: (b, 0, 0, 0)
    cidx = lambda b: (0, 0)

    # explicit scoped-VMEM budget: blocks (double-buffered) + constants +
    # scratch + value intermediates, with headroom, capped at 64 MiB (v7x safe)
    itemsize = x.dtype.itemsize
    const_b = 4 * (2 * rcp * H + 2 * W * ccp + mid * C + mid + C * mid + C)
    slab_b = C * H * W * itemsize
    scratch_b = 2 * C * rcp * W * 4
    interm_b = 8 * C * H * W + 2 * C * rcp * W * 4 + 3 * C * rcp * ccp * 4
    vmem_limit = int(min(max(4 * slab_b + 2 * const_b + scratch_b + 2 * interm_b,
                             16 * 2**20), 64 * 2**20))

    cost = pl.CostEstimate(
        flops=int(B * (4 * C * rcp * H * W          # stage-1 row DFT (re+im)
                       + 8 * C * rcp * W * ccp      # stage-2 complex col DFT
                       + 6 * C * rcp * ccp          # magnitude
                       + 2 * C * H * W              # gate
                       + 4 * mid * C)),             # CA MLP
        transcendentals=int(B * (C * rcp * ccp + C + mid)),
        bytes_accessed=int(2 * B * slab_b + const_b),
    )

    return pl.pallas_call(
        _ca_kernel,
        out_shape=jax.ShapeDtypeStruct((B, C, H, W), x.dtype),
        grid_spec=pltpu.PrefetchScalarGridSpec(
            num_scalar_prefetch=0,
            grid=(B,),
            in_specs=[
                pl.BlockSpec(blk, bidx),            # x
                pl.BlockSpec((rcp, H), cidx),       # Re(F_H) crop rows / cnt
                pl.BlockSpec((rcp, H), cidx),       # Im(F_H) crop rows / cnt
                pl.BlockSpec((W, ccp), cidx),       # Re(F_W) crop cols
                pl.BlockSpec((W, ccp), cidx),       # Im(F_W) crop cols
                pl.BlockSpec((mid, C), cidx),       # W1
                pl.BlockSpec((mid, 1), cidx),       # b1
                pl.BlockSpec((C, mid), cidx),       # W2
                pl.BlockSpec((C, 1), cidx),         # b2
            ],
            out_specs=pl.BlockSpec(blk, bidx),
            scratch_shapes=[pltpu.VMEM((C, rcp, W), jnp.float32),   # A_re
                            pltpu.VMEM((C, rcp, W), jnp.float32)],  # A_im
        ),
        compiler_params=pltpu.CompilerParams(
            dimension_semantics=("parallel",),
            vmem_limit_bytes=vmem_limit),
        cost_estimate=cost,
    )(x, fhr, fhi, fwr, fwi, w1m, b1c, w2m, b2c)


def _reference(x, w1, b1, w2, b2):
    """Pure-JAX reference of CALayer.forward (uses jnp.fft)."""
    _, _, H, W = x.shape
    mag = jnp.abs(jnp.fft.fftshift(jnp.fft.fft2(x), axes=(-2, -1)))
    r0, r1, c0, c1 = _crop_bounds(H, W)
    y = jnp.mean(mag[:, :, r0:r1, c0:c1], axis=(-2, -1))         # (B, C)
    h = jnp.maximum(jnp.dot(y, w1.T, precision="highest") + b1, 0.0)
    z = jax.nn.sigmoid(jnp.dot(h, w2.T, precision="highest") + b2)
    return x * z[:, :, None, None]


if __name__ == "__main__":
    B, C, H, W = 2, 4, 16, 16
    reduction = 16
    mid = max(4, C // reduction)

    kx, k1, k2, k3, k4 = jax.random.split(jax.random.PRNGKey(0), 5)
    x = jax.random.normal(kx, (B, C, H, W), dtype=jnp.float32)
    w1 = 0.05 * jax.random.normal(k1, (mid, C), dtype=jnp.float32)
    b1 = 0.10 * jax.random.normal(k2, (mid,), dtype=jnp.float32)
    w2 = 0.05 * jax.random.normal(k3, (C, mid), dtype=jnp.float32)
    b2 = 0.10 * jax.random.normal(k4, (C,), dtype=jnp.float32)

    out = jax.block_until_ready(ca_layer(x, w1, b1, w2, b2))
    ref = _reference(x, w1, b1, w2, b2)

    assert out.shape == (B, C, H, W)
    # MXU f32 dots use reduced (bf16-pass) precision by default; the error is
    # heavily damped by the 0.05-scale MLP and sigmoid gate, so 2e-2 is ample.
    assert jnp.allclose(out, ref, atol=2e-2, rtol=2e-2), \
        float(jnp.max(jnp.abs(out - ref)))
    print("KERNEL_OK")
</pallas_src>

<mosaic_0001>
module attributes {stable_mosaic.version = 11 : i64} {
  func.func @_ca_kernel(%arg0: i32, %arg1: memref<1x4x16x16xf32, #tpu.memory_space<vmem>>, %arg2: memref<16x16xf32, #tpu.memory_space<vmem>>, %arg3: memref<16x16xf32, #tpu.memory_space<vmem>>, %arg4: memref<16x128xf32, #tpu.memory_space<vmem>>, %arg5: memref<16x128xf32, #tpu.memory_space<vmem>>, %arg6: memref<4x4xf32, #tpu.memory_space<vmem>>, %arg7: memref<4x1xf32, #tpu.memory_space<vmem>>, %arg8: memref<4x4xf32, #tpu.memory_space<vmem>>, %arg9: memref<4x1xf32, #tpu.memory_space<vmem>>, %arg10: memref<1x4x16x16xf32, #tpu.memory_space<vmem>>, %arg11: memref<4x16x16xf32, #tpu.memory_space<vmem>>, %arg12: memref<4x16x16xf32, #tpu.memory_space<vmem>>) attributes {dimension_semantics = [#tpu.dimension_semantics<parallel>], iteration_bounds = array<i64: 2>, scalar_prefetch = 0 : i64, scratch_operands = 2 : i64, tpu.core_type = #tpu.core_type<tc>, window_params = [{transform_indices = @transform_0, window_bounds = array<i64: 1, 4, 16, 16>}, {pipeline_mode = #tpu.pipeline_mode<synchronous>, transform_indices = @transform_1, window_bounds = array<i64: 16, 16>}, {pipeline_mode = #tpu.pipeline_mode<synchronous>, transform_indices = @transform_2, window_bounds = array<i64: 16, 16>}, {pipeline_mode = #tpu.pipeline_mode<synchronous>, transform_indices = @transform_3, window_bounds = array<i64: 16, 128>}, {pipeline_mode = #tpu.pipeline_mode<synchronous>, transform_indices = @transform_4, window_bounds = array<i64: 16, 128>}, {pipeline_mode = #tpu.pipeline_mode<synchronous>, transform_indices = @transform_5, window_bounds = array<i64: 4, 4>}, {pipeline_mode = #tpu.pipeline_mode<synchronous>, transform_indices = @transform_6, window_bounds = array<i64: 4, 1>}, {pipeline_mode = #tpu.pipeline_mode<synchronous>, transform_indices = @transform_7, window_bounds = array<i64: 4, 4>}, {pipeline_mode = #tpu.pipeline_mode<synchronous>, transform_indices = @transform_8, window_bounds = array<i64: 4, 1>}, {transform_indices = @transform_9, window_bounds = array<i64: 1, 4, 16, 16>}]} {
    %c0 = arith.constant 0 : index
    %c0_0 = arith.constant 0 : index
    %0 = vector.load %arg2[%c0, %c0_0] : memref<16x16xf32, #tpu.memory_space<vmem>>, vector<16x16xf32>
    %c0_1 = arith.constant 0 : index
    %c0_2 = arith.constant 0 : index
    %1 = vector.load %arg3[%c0_1, %c0_2] : memref<16x16xf32, #tpu.memory_space<vmem>>, vector<16x16xf32>
    %c0_3 = arith.constant 0 : index
    %c0_4 = arith.constant 0 : index
    %2 = vector.load %arg4[%c0_3, %c0_4] : memref<16x128xf32, #tpu.memory_space<vmem>>, vector<16x128xf32>
    %c0_5 = arith.constant 0 : index
    %c0_6 = arith.constant 0 : index
    %3 = vector.load %arg5[%c0_5, %c0_6] : memref<16x128xf32, #tpu.memory_space<vmem>>, vector<16x128xf32>
    %c0_i32 = arith.constant 0 : i32
    %c4_i32 = arith.constant 4 : i32
    %4 = arith.addi %c0_i32, %c4_i32 : i32
    %c1_i32 = arith.constant 1 : i32
    scf.for %arg13 = %c0_i32 to %4 step %c1_i32  : i32 {
      %c1_i32_41 = arith.constant 1 : i32
      %48 = arith.muli %arg13, %c1_i32_41 : i32
      %c0_i32_42 = arith.constant 0 : i32
      %49 = arith.addi %c0_i32_42, %48 : i32
      %c0_43 = arith.constant 0 : index
      %50 = arith.index_cast %49 : i32 to index
      %c0_44 = arith.constant 0 : index
      %c0_45 = arith.constant 0 : index
      %51 = vector.load %arg1[%c0_43, %50, %c0_44, %c0_45] : memref<1x4x16x16xf32, #tpu.memory_space<vmem>>, vector<1x1x16x16xf32>
      %52 = vector.shape_cast %51 : vector<1x1x16x16xf32> to vector<16x16xf32>
      %cst_46 = arith.constant dense<0.000000e+00> : vector<16x16xf32>
      %53 = tpu.matmul %0, %52, %cst_46 {dimension_numbers = #tpu.dot_dimension_numbers<[1], [0], [0], [1], [0, 0, 1, 1], [], []>} : vector<16x16xf32>, vector<16x16xf32>, vector<16x16xf32> -> vector<16x16xf32>
      %54 = arith.index_cast %49 : i32 to index
      %c0_47 = arith.constant 0 : index
      %c0_48 = arith.constant 0 : index
      %55 = vector.load %arg11[%54, %c0_47, %c0_48] : memref<4x16x16xf32, #tpu.memory_space<vmem>>, vector<1x16x16xf32>
      %56 = vector.shape_cast %55 : vector<1x16x16xf32> to vector<16x16xf32>
      %57 = vector.shape_cast %53 : vector<16x16xf32> to vector<1x16x16xf32>
      tpu.vector_store %arg11[%54, %c0_47, %c0_48], %57 {strides = array<i32>} : memref<4x16x16xf32, #tpu.memory_space<vmem>>, vector<1x16x16xf32>,
      %cst_49 = arith.constant dense<0.000000e+00> : vector<16x16xf32>
      %58 = tpu.matmul %1, %52, %cst_49 {dimension_numbers = #tpu.dot_dimension_numbers<[1], [0], [0], [1], [0, 0, 1, 1], [], []>} : vector<16x16xf32>, vector<16x16xf32>, vector<16x16xf32> -> vector<16x16xf32>
      %59 = arith.index_cast %49 : i32 to index
      %c0_50 = arith.constant 0 : index
      %c0_51 = arith.constant 0 : index
      %60 = vector.load %arg12[%59, %c0_50, %c0_51] : memref<4x16x16xf32, #tpu.memory_space<vmem>>, vector<1x16x16xf32>
      %61 = vector.shape_cast %60 : vector<1x16x16xf32> to vector<16x16xf32>
      %62 = vector.shape_cast %58 : vector<16x16xf32> to vector<1x16x16xf32>
      tpu.vector_store %arg12[%59, %c0_50, %c0_51], %62 {strides = array<i32>} : memref<4x16x16xf32, #tpu.memory_space<vmem>>, vector<1x16x16xf32>,
    }
    %c4_i32_7 = arith.constant 4 : i32
    %c0_8 = arith.constant 0 : index
    %c0_9 = arith.constant 0 : index
    %c0_10 = arith.constant 0 : index
    %5 = vector.load %arg11[%c0_8, %c0_9, %c0_10] : memref<4x16x16xf32, #tpu.memory_space<vmem>>, vector<4x16x16xf32>
    %6 = vector.shape_cast %5 : vector<4x16x16xf32> to vector<64x16xf32>
    %c0_11 = arith.constant 0 : index
    %c0_12 = arith.constant 0 : index
    %c0_13 = arith.constant 0 : index
    %7 = vector.load %arg12[%c0_11, %c0_12, %c0_13] : memref<4x16x16xf32, #tpu.memory_space<vmem>>, vector<4x16x16xf32>
    %8 = vector.shape_cast %7 : vector<4x16x16xf32> to vector<64x16xf32>
    %cst = arith.constant dense<0.000000e+00> : vector<64x128xf32>
    %9 = tpu.matmul %6, %2, %cst {dimension_numbers = #tpu.dot_dimension_numbers<[1], [0], [0], [1], [0, 0, 1, 1], [], []>} : vector<64x16xf32>, vector<16x128xf32>, vector<64x128xf32> -> vector<64x128xf32>
    %cst_14 = arith.constant dense<0.000000e+00> : vector<64x128xf32>
    %10 = tpu.matmul %8, %3, %cst_14 {dimension_numbers = #tpu.dot_dimension_numbers<[1], [0], [0], [1], [0, 0, 1, 1], [], []>} : vector<64x16xf32>, vector<16x128xf32>, vector<64x128xf32> -> vector<64x128xf32>
    %11 = arith.subf %9, %10 : vector<64x128xf32>
    %cst_15 = arith.constant dense<0.000000e+00> : vector<64x128xf32>
    %12 = tpu.matmul %6, %3, %cst_15 {dimension_numbers = #tpu.dot_dimension_numbers<[1], [0], [0], [1], [0, 0, 1, 1], [], []>} : vector<64x16xf32>, vector<16x128xf32>, vector<64x128xf32> -> vector<64x128xf32>
    %cst_16 = arith.constant dense<0.000000e+00> : vector<64x128xf32>
    %13 = tpu.matmul %8, %2, %cst_16 {dimension_numbers = #tpu.dot_dimension_numbers<[1], [0], [0], [1], [0, 0, 1, 1], [], []>} : vector<64x16xf32>, vector<16x128xf32>, vector<64x128xf32> -> vector<64x128xf32>
    %14 = arith.addf %12, %13 : vector<64x128xf32>
    %15 = arith.mulf %11, %11 : vector<64x128xf32>
    %16 = arith.mulf %14, %14 : vector<64x128xf32>
    %17 = arith.addf %15, %16 : vector<64x128xf32>
    %18 = math.sqrt %17 : vector<64x128xf32>
    %19 = vector.shape_cast %18 : vector<64x128xf32> to vector<4x16x128xf32>
    %cst_17 = arith.constant dense<0.000000e+00> : vector<4x16xf32>
    %20 = vector.multi_reduction <add>, %19, %cst_17 [2] : vector<4x16x128xf32> to vector<4x16xf32>
    %cst_18 = arith.constant dense<0.000000e+00> : vector<4xf32>
    %21 = vector.multi_reduction <add>, %20, %cst_18 [1] : vector<4x16xf32> to vector<4xf32>
    %22 = vector.shape_cast %21 : vector<4xf32> to vector<4x1xf32>
    %c0_19 = arith.constant 0 : index
    %c0_20 = arith.constant 0 : index
    %23 = vector.load %arg6[%c0_19, %c0_20] : memref<4x4xf32, #tpu.memory_space<vmem>>, vector<4x4xf32>
    %cst_21 = arith.constant dense<0.000000e+00> : vector<4x1xf32>
    %24 = tpu.matmul %23, %22, %cst_21 {dimension_numbers = #tpu.dot_dimension_numbers<[1], [0], [0], [1], [0, 0, 1, 1], [], []>} : vector<4x4xf32>, vector<4x1xf32>, vector<4x1xf32> -> vector<4x1xf32>
    %c0_22 = arith.constant 0 : index
    %c0_23 = arith.constant 0 : index
    %25 = vector.load %arg7[%c0_22, %c0_23] : memref<4x1xf32, #tpu.memory_space<vmem>>, vector<4x1xf32>
    %26 = arith.addf %24, %25 : vector<4x1xf32>
    %cst_24 = arith.constant 0.000000e+00 : f32
    %27 = vector.broadcast %cst_24 : f32 to vector<4x1xf32>
    %28 = arith.maximumf %26, %27 : vector<4x1xf32>
    %c0_25 = arith.constant 0 : index
    %c0_26 = arith.constant 0 : index
    %29 = vector.load %arg8[%c0_25, %c0_26] : memref<4x4xf32, #tpu.memory_space<vmem>>, vector<4x4xf32>
    %cst_27 = arith.constant dense<0.000000e+00> : vector<4x1xf32>
    %30 = tpu.matmul %29, %28, %cst_27 {dimension_numbers = #tpu.dot_dimension_numbers<[1], [0], [0], [1], [0, 0, 1, 1], [], []>} : vector<4x4xf32>, vector<4x1xf32>, vector<4x1xf32> -> vector<4x1xf32>
    %c0_28 = arith.constant 0 : index
    %c0_29 = arith.constant 0 : index
    %31 = vector.load %arg9[%c0_28, %c0_29] : memref<4x1xf32, #tpu.memory_space<vmem>>, vector<4x1xf32>
    %32 = arith.addf %30, %31 : vector<4x1xf32>
    %cst_30 = arith.constant 0.000000e+00 : f32
    %33 = vector.broadcast %cst_30 : f32 to vector<4x1xf32>
    %34 = arith.subf %33, %32 : vector<4x1xf32>
    %35 = math.exp %34 : vector<4x1xf32>
    %cst_31 = arith.constant 1.000000e+00 : f32
    %36 = vector.broadcast %cst_31 : f32 to vector<4x1xf32>
    %37 = arith.addf %36, %35 : vector<4x1xf32>
    %cst_32 = arith.constant 1.000000e+00 : f32
    %38 = vector.broadcast %cst_32 : f32 to vector<4x1xf32>
    %39 = arith.divf %38, %37 : vector<4x1xf32>
    %c0_33 = arith.constant 0 : index
    %c0_34 = arith.constant 0 : index
    %c0_35 = arith.constant 0 : index
    %c0_36 = arith.constant 0 : index
    %40 = vector.load %arg1[%c0_33, %c0_34, %c0_35, %c0_36] : memref<1x4x16x16xf32, #tpu.memory_space<vmem>>, vector<1x4x16x16xf32>
    %41 = vector.shape_cast %40 : vector<1x4x16x16xf32> to vector<4x16x16xf32>
    %42 = vector.shape_cast %39 : vector<4x1xf32> to vector<4x1x1xf32>
    %43 = vector.broadcast %42 : vector<4x1x1xf32> to vector<4x16x16xf32>
    %44 = arith.mulf %41, %43 : vector<4x16x16xf32>
    %c0_37 = arith.constant 0 : index
    %c0_38 = arith.constant 0 : index
    %c0_39 = arith.constant 0 : index
    %c0_40 = arith.constant 0 : index
    %45 = vector.load %arg10[%c0_37, %c0_38, %c0_39, %c0_40] : memref<1x4x16x16xf32, #tpu.memory_space<vmem>>, vector<1x4x16x16xf32>
    %46 = vector.shape_cast %45 : vector<1x4x16x16xf32> to vector<4x16x16xf32>
    %47 = vector.shape_cast %44 : vector<4x16x16xf32> to vector<1x4x16x16xf32>
    tpu.vector_store %arg10[%c0_37, %c0_38, %c0_39, %c0_40], %47 {strides = array<i32>} : memref<1x4x16x16xf32, #tpu.memory_space<vmem>>, vector<1x4x16x16xf32>,
    return
  }
  func.func @transform_0(%arg0: i32) -> (i32, i32, i32, i32) {
    %c0_i32 = arith.constant 0 : i32
    %c0_i32_0 = arith.constant 0 : i32
    %c0_i32_1 = arith.constant 0 : i32
    %c0_i32_2 = arith.constant 0 : i32
    return %arg0, %c0_i32, %c0_i32_0, %c0_i32_1 : i32, i32, i32, i32
  }
  func.func @transform_1(%arg0: i32) -> (i32, i32) {
    %c0_i32 = arith.constant 0 : i32
    %c0_i32_0 = arith.constant 0 : i32
    %c0_i32_1 = arith.constant 0 : i32
    return %c0_i32, %c0_i32_0 : i32, i32
  }
  func.func @transform_2(%arg0: i32) -> (i32, i32) {
    %c0_i32 = arith.constant 0 : i32
    %c0_i32_0 = arith.constant 0 : i32
    %c0_i32_1 = arith.constant 0 : i32
    return %c0_i32, %c0_i32_0 : i32, i32
  }
  func.func @transform_3(%arg0: i32) -> (i32, i32) {
    %c0_i32 = arith.constant 0 : i32
    %c0_i32_0 = arith.constant 0 : i32
    %c0_i32_1 = arith.constant 0 : i32
    return %c0_i32, %c0_i32_0 : i32, i32
  }
  func.func @transform_4(%arg0: i32) -> (i32, i32) {
    %c0_i32 = arith.constant 0 : i32
    %c0_i32_0 = arith.constant 0 : i32
    %c0_i32_1 = arith.constant 0 : i32
    return %c0_i32, %c0_i32_0 : i32, i32
  }
  func.func @transform_5(%arg0: i32) -> (i32, i32) {
    %c0_i32 = arith.constant 0 : i32
    %c0_i32_0 = arith.constant 0 : i32
    %c0_i32_1 = arith.constant 0 : i32
    return %c0_i32, %c0_i32_0 : i32, i32
  }
  func.func @transform_6(%arg0: i32) -> (i32, i32) {
    %c0_i32 = arith.constant 0 : i32
    %c0_i32_0 = arith.constant 0 : i32
    %c0_i32_1 = arith.constant 0 : i32
    return %c0_i32, %c0_i32_0 : i32, i32
  }
  func.func @transform_7(%arg0: i32) -> (i32, i32) {
    %c0_i32 = arith.constant 0 : i32
    %c0_i32_0 = arith.constant 0 : i32
    %c0_i32_1 = arith.constant 0 : i32
    return %c0_i32, %c0_i32_0 : i32, i32
  }
  func.func @transform_8(%arg0: i32) -> (i32, i32) {
    %c0_i32 = arith.constant 0 : i32
    %c0_i32_0 = arith.constant 0 : i32
    %c0_i32_1 = arith.constant 0 : i32
    return %c0_i32, %c0_i32_0 : i32, i32
  }
  func.func @transform_9(%arg0: i32) -> (i32, i32, i32, i32) {
    %c0_i32 = arith.constant 0 : i32
    %c0_i32_0 = arith.constant 0 : i32
    %c0_i32_1 = arith.constant 0 : i32
    %c0_i32_2 = arith.constant 0 : i32
    return %arg0, %c0_i32, %c0_i32_0, %c0_i32_1 : i32, i32, i32, i32
  }
}

</mosaic_0001>

<llo_original>
// kernel: ca_layer.1
$region0: #{ca_layer.1}
  #allocation0 [shape = 'u32[]', space=smem, size = 0x4, offset = 0x4, fixed_abs, tag = 'smem constant byte address 0x4 - core index']
  #allocation1 [shape = 'u32[144,128]{1,0:T(1,128)}', space=vmem, size = 0x12000, scoped, tag = 'internal scratch']
  #allocation2 [shape = 'f32[4,16,16]{2,1,0:T(8,128)}', space=vmem, size = 0x8000, scoped, tag = 'scratch operand']
  #allocation3 [shape = 'f32[4,16,16]{2,1,0:T(8,128)}', space=vmem, size = 0x8000, scoped, tag = 'scratch operand']
  %s0 = inlined_call_operand.vmem [shape: f32[2,4,16,16], index: 0, kind: input, shape index: {}]
  %s1 = inlined_call_operand.vmem [shape: f32[16,16], index: 1, kind: input, shape index: {}]
  %s2 = inlined_call_operand.vmem [shape: f32[16,16], index: 2, kind: input, shape index: {}]
  %s3 = inlined_call_operand.vmem [shape: f32[16,128], index: 3, kind: input, shape index: {}]
  %s4 = inlined_call_operand.vmem [shape: f32[16,128], index: 4, kind: input, shape index: {}]
  %s5 = inlined_call_operand.vmem [shape: f32[4,4], index: 5, kind: input, shape index: {}]
  %s6 = inlined_call_operand.vmem [shape: f32[4,1], index: 6, kind: input, shape index: {}]
  %s7 = inlined_call_operand.vmem [shape: f32[4,4], index: 7, kind: input, shape index: {}]
  %s8 = inlined_call_operand.vmem [shape: f32[4,1], index: 8, kind: input, shape index: {}]
  %s9 = inlined_call_operand.hbm [shape: f32[2,4,16,16], index: 9, kind: output, shape index: {}]
  %s10 = sld [smem:[#allocation0]]
  $region76: #{ca_layer.1} parent=0
    _
  %s12 = ssub.s32 1, %s10
  %s13 = scalar_select 0, %s12, %s10
  $region1: #{ca_layer.1} parent=0
    #allocation4 [shape = 'u8[65536]{0}', space=vmem, size = 0x10000, scoped, tag = 'output window, operand 0']
    #allocation5 [shape = 's32[2]{0}', space=sflag, size = 0x8, scoped, tag = 'scoped memory for ca_layer.1']
    %14 = vsyncpa [#allocation5], 0
    %s15 = scalar_lea.sflag [#allocation5], 1
    %16 = vsyncpa %s15, 0
    loop: start=0, step=1, limit=4
    $region2: #{ca_layer.1} parent=1 // loop_pre_header
      _
    $region3: #{ca_layer.1} parent=1 // loop_header
      %s18 = sphi 0, %s22
      %p19 = scmp.ge.s32.totalorder %s18, 4
      %s28 = sphi 0, %s30
      %s31 = sphi 0, %s28
      %s32 = sphi 0, %s31
      %s48 = sphi 0, %s32
      %s52 = sphi 0, %s52
      %s54 = sphi 0, %s52
      %s55 = sphi 0, %s54
      %s69 = sphi 0, %s55
      %s73 = sphi 0, %s73
      %s75 = sphi 0, %s73
      %s76 = sphi 0, %s75
      %s90 = sphi 0, %s76
      %s94 = sphi 0, %s94
      %s96 = sphi 0, %s94
      %s97 = sphi 0, %s96
      %s111 = sphi 0, %s97
      %s115 = sphi 0, %s115
      %s117 = sphi 0, %s115
      %s118 = sphi 0, %s117
      %s132 = sphi 0, %s118
      %s136 = sphi 0, %s136
      %s138 = sphi 0, %s136
      %s139 = sphi 0, %s138
      %s153 = sphi 0, %s139
      %s157 = sphi 0, %s157
      %s159 = sphi 0, %s157
      %s160 = sphi 0, %s159
      %s174 = sphi 0, %s160
      %s178 = sphi 0, %s178
      %s180 = sphi 0, %s178
      %s181 = sphi 0, %s180
      %s195 = sphi 0, %s181
      %s199 = sphi 0, %s199
      %s201 = sphi 0, %s199
      %s202 = sphi 0, %s201
      %s216 = sphi 0, %s202
      %s222 = sphi 0, %s224
      %s225 = sphi 0, %s222
      %s226 = sphi 0, %s225
      %s242 = sphi 0, %s226
    $region4: #{ca_layer.1} parent=1 // loop_header_branch
      %21 = sbr.rel (%p19) target = $region8
    $region5: #{ca_layer.1} parent=1 // loop_body
      %s23 = ssub.s32 %s18, 1
      %s24 = ssub.s32 %s18, 2
      %s25 = sadd.s32 %s18, 1
      %s26 = ssub.s32 %s18, %s25
      %p27 = scmp.eq.s32.totalorder %s26, 0
      %s29 = sadd.s32 %s28, 1
      %s30 = scalar_select %p27, %s28, %s29
      %p33 = pneg %p27
      %p34 = scmp.eq.s32.totalorder %s18, 1
      %p35 = por %p33, %p34
      %p36 = scmp.ne.s32.totalorder %s28, %s31
      %p37 = scmp.eq.s32.totalorder %s18, 0
      %p38 = por %p36, %p37
      %p39 = scmp.ne.s32.totalorder %s28, %s31
      %p40 = scmp.eq.s32.totalorder %s23, 1
      %p41 = por %p39, %p40
      %p42 = scmp.ne.s32.totalorder %s31, %s32
      %p43 = scmp.eq.s32.totalorder %s23, 0
      %p44 = por %p42, %p43
      %p45 = scmp.ne.s32.totalorder %s31, %s32
      %p46 = scmp.eq.s32.totalorder %s24, 1
      %p47 = por %p45, %p46
      %p49 = scmp.ne.s32.totalorder %s32, %s48
      %p50 = scmp.eq.s32.totalorder %s24, 0
      %p51 = por %p49, %p50
      %s53 = sadd.s32 %s52, 1
      %p56 = scmp.eq.s32.totalorder %s18, 1
      %p57 = scmp.ne.s32.totalorder %s52, %s54
      %p58 = scmp.eq.s32.totalorder %s18, 0
      %p59 = por %p57, %p58
      %p60 = scmp.ne.s32.totalorder %s52, %s54
      %p61 = scmp.eq.s32.totalorder %s23, 1
      %p62 = por %p60, %p61
      %p63 = scmp.ne.s32.totalorder %s54, %s55
      %p64 = scmp.eq.s32.totalorder %s23, 0
      %p65 = por %p63, %p64
      %p66 = scmp.ne.s32.totalorder %s54, %s55
      %p67 = scmp.eq.s32.totalorder %s24, 1
      %p68 = por %p66, %p67
      %p70 = scmp.ne.s32.totalorder %s55, %s69
      %p71 = scmp.eq.s32.totalorder %s24, 0
      %p72 = por %p70, %p71
      %s74 = sadd.s32 %s73, 1
      %p77 = scmp.eq.s32.totalorder %s18, 1
      %p78 = scmp.ne.s32.totalorder %s73, %s75
      %p79 = scmp.eq.s32.totalorder %s18, 0
      %p80 = por %p78, %p79
      %p81 = scmp.ne.s32.totalorder %s73, %s75
      %p82 = scmp.eq.s32.totalorder %s23, 1
      %p83 = por %p81, %p82
      %p84 = scmp.ne.s32.totalorder %s75, %s76
      %p85 = scmp.eq.s32.totalorder %s23, 0
      %p86 = por %p84, %p85
      %p87 = scmp.ne.s32.totalorder %s75, %s76
      %p88 = scmp.eq.s32.totalorder %s24, 1
      %p89 = por %p87, %p88
      %p91 = scmp.ne.s32.totalorder %s76, %s90
      %p92 = scmp.eq.s32.totalorder %s24, 0
      %p93 = por %p91, %p92
      %s95 = sadd.s32 %s94, 1
      %p98 = scmp.eq.s32.totalorder %s18, 1
      %p99 = scmp.ne.s32.totalorder %s94, %s96
      %p100 = scmp.eq.s32.totalorder %s18, 0
      %p101 = por %p99, %p100
      %p102 = scmp.ne.s32.totalorder %s94, %s96
      %p103 = scmp.eq.s32.totalorder %s23, 1
      %p104 = por %p102, %p103
      %p105 = scmp.ne.s32.totalorder %s96, %s97
      %p106 = scmp.eq.s32.totalorder %s23, 0
      %p107 = por %p105, %p106
      %p108 = scmp.ne.s32.totalorder %s96, %s97
      %p109 = scmp.eq.s32.totalorder %s24, 1
      %p110 = por %p108, %p109
      %p112 = scmp.ne.s32.totalorder %s97, %s111
      %p113 = scmp.eq.s32.totalorder %s24, 0
      %p114 = por %p112, %p113
      %s116 = sadd.s32 %s115, 1
      %p119 = scmp.eq.s32.totalorder %s18, 1
      %p120 = scmp.ne.s32.totalorder %s115, %s117
      %p121 = scmp.eq.s32.totalorder %s18, 0
      %p122 = por %p120, %p121
      %p123 = scmp.ne.s32.totalorder %s115, %s117
      %p124 = scmp.eq.s32.totalorder %s23, 1
      %p125 = por %p123, %p124
      %p126 = scmp.ne.s32.totalorder %s117, %s118
      %p127 = scmp.eq.s32.totalorder %s23, 0
      %p128 = por %p126, %p127
      %p129 = scmp.ne.s32.totalorder %s117, %s118
      %p130 = scmp.eq.s32.totalorder %s24, 1
      %p131 = por %p129, %p130
      %p133 = scmp.ne.s32.totalorder %s118, %s132
      %p134 = scmp.eq.s32.totalorder %s24, 0
      %p135 = por %p133, %p134
      %s137 = sadd.s32 %s136, 1
      %p140 = scmp.eq.s32.totalorder %s18, 1
      %p141 = scmp.ne.s32.totalorder %s136, %s138
      %p142 = scmp.eq.s32.totalorder %s18, 0
      %p143 = por %p141, %p142
      %p144 = scmp.ne.s32.totalorder %s136, %s138
      %p145 = scmp.eq.s32.totalorder %s23, 1
      %p146 = por %p144, %p145
      %p147 = scmp.ne.s32.totalorder %s138, %s139
      %p148 = scmp.eq.s32.totalorder %s23, 0
      %p149 = por %p147, %p148
      %p150 = scmp.ne.s32.totalorder %s138, %s139
      %p151 = scmp.eq.s32.totalorder %s24, 1
      %p152 = por %p150, %p151
      %p154 = scmp.ne.s32.totalorder %s139, %s153
      %p155 = scmp.eq.s32.totalorder %s24, 0
      %p156 = por %p154, %p155
      %s158 = sadd.s32 %s157, 1
      %p161 = scmp.eq.s32.totalorder %s18, 1
      %p162 = scmp.ne.s32.totalorder %s157, %s159
      %p163 = scmp.eq.s32.totalorder %s18, 0
      %p164 = por %p162, %p163
      %p165 = scmp.ne.s32.totalorder %s157, %s159
      %p166 = scmp.eq.s32.totalorder %s23, 1
      %p167 = por %p165, %p166
      %p168 = scmp.ne.s32.totalorder %s159, %s160
      %p169 = scmp.eq.s32.totalorder %s23, 0
      %p170 = por %p168, %p169
      %p171 = scmp.ne.s32.totalorder %s159, %s160
      %p172 = scmp.eq.s32.totalorder %s24, 1
      %p173 = por %p171, %p172
      %p175 = scmp.ne.s32.totalorder %s160, %s174
      %p176 = scmp.eq.s32.totalorder %s24, 0
      %p177 = por %p175, %p176
      %s179 = sadd.s32 %s178, 1
      %p182 = scmp.eq.s32.totalorder %s18, 1
      %p183 = scmp.ne.s32.totalorder %s178, %s180
      %p184 = scmp.eq.s32.totalorder %s18, 0
      %p185 = por %p183, %p184
      %p186 = scmp.ne.s32.totalorder %s178, %s180
      %p187 = scmp.eq.s32.totalorder %s23, 1
      %p188 = por %p186, %p187
      %p189 = scmp.ne.s32.totalorder %s180, %s181
      %p190 = scmp.eq.s32.totalorder %s23, 0
      %p191 = por %p189, %p190
      %p192 = scmp.ne.s32.totalorder %s180, %s181
      %p193 = scmp.eq.s32.totalorder %s24, 1
      %p194 = por %p192, %p193
      %p196 = scmp.ne.s32.totalorder %s181, %s195
      %p197 = scmp.eq.s32.totalorder %s24, 0
      %p198 = por %p196, %p197
      %s200 = sadd.s32 %s199, 1
      %p203 = scmp.eq.s32.totalorder %s18, 1
      %p204 = scmp.ne.s32.totalorder %s199, %s201
      %p205 = scmp.eq.s32.totalorder %s18, 0
      %p206 = por %p204, %p205
      %p207 = scmp.ne.s32.totalorder %s199, %s201
      %p208 = scmp.eq.s32.totalorder %s23, 1
      %p209 = por %p207, %p208
      %p210 = scmp.ne.s32.totalorder %s201, %s202
      %p211 = scmp.eq.s32.totalorder %s23, 0
      %p212 = por %p210, %p211
      %p213 = scmp.ne.s32.totalorder %s201, %s202
      %p214 = scmp.eq.s32.totalorder %s24, 1
      %p215 = por %p213, %p214
      %p217 = scmp.ne.s32.totalorder %s202, %s216
      %p218 = scmp.eq.s32.totalorder %s24, 0
      %p219 = por %p217, %p218
      %s220 = ssub.s32 %s18, %s25
      %p221 = scmp.eq.s32.totalorder %s220, 0
      %s223 = sadd.s32 %s222, 1
      %s224 = scalar_select %p221, %s222, %s223
      %p227 = pneg %p221
      %p228 = scmp.eq.s32.totalorder %s18, 1
      %p229 = por %p227, %p228
      %p230 = scmp.ne.s32.totalorder %s222, %s225
      %p231 = scmp.eq.s32.totalorder %s18, 0
      %p232 = por %p230, %p231
      %p233 = scmp.ne.s32.totalorder %s222, %s225
      %p234 = scmp.eq.s32.totalorder %s23, 1
      %p235 = por %p233, %p234
      %p236 = scmp.ne.s32.totalorder %s225, %s226
      %p237 = scmp.eq.s32.totalorder %s23, 0
      %p238 = por %p236, %p237
      %p239 = scmp.ne.s32.totalorder %s225, %s226
      %p240 = scmp.eq.s32.totalorder %s24, 1
      %p241 = por %p239, %p240
      %p243 = scmp.ne.s32.totalorder %s226, %s242
      %p244 = scmp.eq.s32.totalorder %s24, 0
      %p245 = por %p243, %p244
      %p246 = scmp.le.s32.totalorder 1, %s18
      %p247 = scmp.lt.s32.totalorder %s18, 3
      %p248 = pnand %p246, %p247
      %p249 = pneg %p248
      // Predicated region
      $region9: #{ca_layer.1} parent=5 // pred_check
        _
      $region10: #{ca_layer.1} parent=5 // pred_check_branch
        %251 = sbr.rel (%p248) target = $region12
      $region11: #{ca_layer.1} parent=5 // pred_region
        %s252 = ssub.s32 %s18, 1
        // Predicated region
        $region13: #{ca_layer.1} parent=11 // pred_check
          %p253 = pneg %p65
        $region14: #{ca_layer.1} parent=11 // pred_check_branch
          %255 = sbr.rel (%p253) target = $region16
        $region15: #{ca_layer.1} parent=11 // pred_region
          _
        $region16: #{ca_layer.1} parent=11 // pred_fallthru
          _
        // Predicated region
        $region17: #{ca_layer.1} parent=11 // pred_check
          %p256 = pneg %p86
        $region18: #{ca_layer.1} parent=11 // pred_check_branch
          %258 = sbr.rel (%p256) target = $region20
        $region19: #{ca_layer.1} parent=11 // pred_region
          _
        $region20: #{ca_layer.1} parent=11 // pred_fallthru
          _
        // Predicated region
        $region21: #{ca_layer.1} parent=11 // pred_check
          %p259 = pneg %p107
        $region22: #{ca_layer.1} parent=11 // pred_check_branch
          %261 = sbr.rel (%p259) target = $region24
        $region23: #{ca_layer.1} parent=11 // pred_region
          _
        $region24: #{ca_layer.1} parent=11 // pred_fallthru
          _
        // Predicated region
        $region25: #{ca_layer.1} parent=11 // pred_check
          %p262 = pneg %p128
        $region26: #{ca_layer.1} parent=11 // pred_check_branch
          %264 = sbr.rel (%p262) target = $region28
        $region27: #{ca_layer.1} parent=11 // pred_region
          _
        $region28: #{ca_layer.1} parent=11 // pred_fallthru
          _
        // Predicated region
        $region29: #{ca_layer.1} parent=11 // pred_check
          %p265 = pneg %p149
        $region30: #{ca_layer.1} parent=11 // pred_check_branch
          %267 = sbr.rel (%p265) target = $region32
        $region31: #{ca_layer.1} parent=11 // pred_region
          _
        $region32: #{ca_layer.1} parent=11 // pred_fallthru
          _
        // Predicated region
        $region33: #{ca_layer.1} parent=11 // pred_check
          %p268 = pneg %p170
        $region34: #{ca_layer.1} parent=11 // pred_check_branch
          %270 = sbr.rel (%p268) target = $region36
        $region35: #{ca_layer.1} parent=11 // pred_region
          _
        $region36: #{ca_layer.1} parent=11 // pred_fallthru
          _
        // Predicated region
        $region37: #{ca_layer.1} parent=11 // pred_check
          %p271 = pneg %p191
        $region38: #{ca_layer.1} parent=11 // pred_check_branch
          %273 = sbr.rel (%p271) target = $region40
        $region39: #{ca_layer.1} parent=11 // pred_region
          _
        $region40: #{ca_layer.1} parent=11 // pred_fallthru
          _
        // Predicated region
        $region41: #{ca_layer.1} parent=11 // pred_check
          %p274 = pneg %p212
        $region42: #{ca_layer.1} parent=11 // pred_check_branch
          %276 = sbr.rel (%p274) target = $region44
        $region43: #{ca_layer.1} parent=11 // pred_region
          _
        $region44: #{ca_layer.1} parent=11 // pred_fallthru
          _
      $region12: #{ca_layer.1} parent=5 // pred_fallthru
        _
      %p277 = scmp.lt.s32.totalorder %s18, 2
      // Predicated region
      $region45: #{ca_layer.1} parent=5 // pred_check
        %p278 = pneg %p277
      $region46: #{ca_layer.1} parent=5 // pred_check_branch
        %280 = sbr.rel (%p278) target = $region48
      $region47: #{ca_layer.1} parent=5 // pred_region
        // Predicated region
        $region49: #{ca_layer.1} parent=47 // pred_check
          %p281 = pneg %p38
        $region50: #{ca_layer.1} parent=47 // pred_check_branch
          %283 = sbr.rel (%p281) target = $region52
        $region51: #{ca_layer.1} parent=47 // pred_region
          %p284 = scmp.lt.s32.totalorder %s18, 1
          %s285 = scalar_select %p284, %s18, 1
          %s286 = smul.addr %s285, 8
          %s287 = smul.addr %s286, 8
          %s288 = scalar_lea.vmem %s0, %s287
        $region52: #{ca_layer.1} parent=47 // pred_fallthru
          _
      $region48: #{ca_layer.1} parent=5 // pred_fallthru
        _
      %p289 = scmp.le.s32.totalorder 1, %s18
      %p290 = scmp.lt.s32.totalorder %s18, 3
      %p291 = pnand %p289, %p290
      %p292 = pneg %p291
      // Predicated region
      $region53: #{ca_layer.1} parent=5 // pred_check
        _
      $region54: #{ca_layer.1} parent=5 // pred_check_branch
        %294 = sbr.rel (%p291) target = $region56
      $region55: #{ca_layer.1} parent=5 // pred_region
        %s295 = ssub.s32 %s18, 1
        %p296 = scmp.lt.s32.totalorder %s23, 1
        %s297 = scalar_select %p296, %s23, 1
        %s298 = smul.addr %s297, 8
        %s299 = smul.addr %s298, 8
        %s300 = scalar_lea.vmem %s0, %s299
        %p301 = pneg %p44
        %p302 = pneg %p41
        %p303 = pneg %p65
        %p304 = pneg %p62
        %p305 = pneg %p86
        %p306 = pneg %p83
        %p307 = pneg %p107
        %p308 = pneg %p104
        %p309 = pneg %p128
        %p310 = pneg %p125
        %p311 = pneg %p149
        %p312 = pneg %p146
        %p313 = pneg %p170
        %p314 = pneg %p167
        %p315 = pneg %p191
        %p316 = pneg %p188
        %p317 = pneg %p212
        %p318 = pneg %p209
        %p319 = pneg %p238
        %p320 = pneg %p235
        %s321 = sand.u32 %s225, 1
        %s322 = scalar_lea.sflag [#allocation5], %s321
        %s323 = sand.u32 %s225, 1
        %s324 = smul.addr %s323, 64
        %s325 = scalar_lea.vmem [#allocation4], %s324
        %p326 = scmp.lt.s32.totalorder %s23, 1
        %s327 = scalar_select %p326, %s23, 1
        %s328 = smul.addr %s327, 8
        %s329 = smul.addr %s328, 8
        %s330 = scalar_lea.vmem %s0, %s329
        %v331 = vld [vmem:[%s1] sm:$0xff]
        %v332 = vld [vmem:[%s1 + $0x8] sm:$0xff]
        %v333 = vld [vmem:[%s2] sm:$0xff]
        %v334 = vld [vmem:[%s2 + $0x8] sm:$0xff]
        %v335 = vld [vmem:[%s3] sm:$0xff]
        %v336 = vld [vmem:[%s3 + $0x8] sm:$0xff]
        %v337 = vld [vmem:[%s4] sm:$0xff]
        %v338 = vld [vmem:[%s4 + $0x8] sm:$0xff]
        loop: start=0, step=1, limit=4
        $region57: #{ca_layer.1} parent=55 // loop_pre_header
          _
        $region58: #{ca_layer.1} parent=55 // loop_header
          %s340 = sphi 0, %s344
          %p341 = scmp.ge.s32.totalorder %s340, 4
        $region59: #{ca_layer.1} parent=55 // loop_header_branch
          %343 = sbr.rel (%p341) target = $region63
        $region60: #{ca_layer.1} parent=55 // loop_body
          %s345 = smul.u32 %s340, 16
          %s346 = scalar_lea.vmem %s330, %s345
          %v347 = vld [vmem:[%s346] sm:$0xff]
          %v348 = vld [vmem:[%s346 + $0x8] sm:$0xff]
          %vm349 = vcmask 130048
          %v351 = vsel %vm349, %v331, 0
          %v354 = vsel %vm349, %v332, 0
          %356 = vmatprep.subr.mxu0 0.0
          %357 = vmatpush1.msra.mxu0 %v347
          %358 = vmatprep.subr.mxu0 0.0
          %359 = vmatpush1.msra.mxu0 %v348
          %360 = vmatprep.subr.mxu0 0.0
          %361 = vmatpush1.msra.mxu0 0.0
          %362 = vmatprep.subr.mxu0 0.0
          %363 = vmatpush1.msra.mxu0 0.0
          %364 = vmatprep.subr.mxu0 0.0
          %365 = vmatpush1.msra.mxu0 0.0
          %366 = vmatprep.subr.mxu0 0.0
          %367 = vmatpush1.msra.mxu0 0.0
          %368 = vmatprep.subr.mxu0 0.0
          %369 = vmatpush1.msra.mxu0 0.0
          %370 = vmatprep.subr.mxu0 0.0
          %371 = vmatpush1.msra.mxu0 0.0
          %372 = vmatprep.subr.mxu0 0.0
          %373 = vmatpush1.msra.mxu0 0.0
          %374 = vmatprep.subr.mxu0 0.0
          %375 = vmatpush1.msra.mxu0 0.0
          %376 = vmatprep.subr.mxu0 0.0
          %377 = vmatpush1.msra.mxu0 0.0
          %378 = vmatprep.subr.mxu0 0.0
          %379 = vmatpush1.msra.mxu0 0.0
          %380 = vmatprep.subr.mxu0 0.0
          %381 = vmatpush1.msra.mxu0 0.0
          %382 = vmatprep.subr.mxu0 0.0
          %383 = vmatpush1.msra.mxu0 0.0
          %384 = vmatprep.subr.mxu0 0.0
          %385 = vmatpush1.msra.mxu0 0.0
          %386 = vmatprep.subr.mxu0 0.0
          %387 = vmatpush1.msra.mxu0 0.0
          %388 = vmatprep.subr.mxu0 0.0
          %389 = vmatpush1.msra.mxu0 0.0
          %390 = vmatprep.subr.mxu0 0.0
          %391 = vmatpush1.msra.mxu0 0.0
          %392 = vmatprep.subr.mxu0 0.0
          %393 = vmatpush1.msra.mxu0 0.0
          %394 = vmatprep.subr.mxu0 0.0
          %395 = vmatpush1.msra.mxu0 0.0
          %396 = vmatprep.subr.mxu0 0.0
          %397 = vmatpush1.msra.mxu0 0.0
          %398 = vmatprep.subr.mxu0 0.0
          %399 = vmatpush1.msra.mxu0 0.0
          %400 = vmatprep.subr.mxu0 0.0
          %401 = vmatpush1.msra.mxu0 0.0
          %402 = vmatprep.subr.mxu0 0.0
          %403 = vmatpush1.msra.mxu0 0.0
          %404 = vmatprep.subr.mxu0 0.0
          %405 = vmatpush1.msra.mxu0 0.0
          %406 = vmatprep.subr.mxu0 0.0
          %407 = vmatpush1.msra.mxu0 0.0
          %408 = vmatprep.subr.mxu0 0.0
          %409 = vmatpush1.msra.mxu0 0.0
          %410 = vmatprep.subr.mxu0 0.0
          %411 = vmatpush1.msra.mxu0 0.0
          %412 = vmatprep.subr.mxu0 0.0
          %413 = vmatpush1.msra.mxu0 0.0
          %414 = vmatprep.subr.mxu0 0.0
          %415 = vmatpush1.msra.mxu0 0.0
          %416 = vmatprep.subr.mxu0 0.0
          %417 = vmatpush1.msra.mxu0 0.0
          %418 = vmatprep.subr.mxu0 0.0
          %419 = vmatpush1.msra.mxu0 0.0
          %420 = vmatprep.mubr.f32.mxu0 0.0
          %421 = vmatmul.mubr.f32.gmra.mrb[0].mxu0 %v351
          %v422 = vpop.f32.mrb[0].mxu0
          %v423 = vadd.f32 0.0, %v422
          %v424 = vpop.f32.mrb[0].mxu0
          %425 = vmatprep.mubr.f32.mxu0 0.0
          %426 = vmatmul.mubr.f32.gmra.mrb[0].mxu0 %v354
          %v427 = vpop.f32.mrb[0].mxu0
          %v428 = vadd.f32 0.0, %v427
          %v429 = vpop.f32.mrb[0].mxu0
          %430 = vdwg.mxu0
          %s431 = scalar_lea.vmem [#allocation2], %s345
          %432 = vst.msk [vmem:[%s431] sm:$0xff] %vm349, %v423
          %433 = vst.msk [vmem:[%s431 + $0x8] sm:$0xff] %vm349, %v428
          %v435 = vsel %vm349, %v333, 0
          %v438 = vsel %vm349, %v334, 0
          %440 = vmatprep.subr.mxu0 0.0
          %441 = vmatpush1.msra.mxu0 %v347
          %442 = vmatprep.subr.mxu0 0.0
          %443 = vmatpush1.msra.mxu0 %v348
          %444 = vmatprep.subr.mxu0 0.0
          %445 = vmatpush1.msra.mxu0 0.0
          %446 = vmatprep.subr.mxu0 0.0
          %447 = vmatpush1.msra.mxu0 0.0
          %448 = vmatprep.subr.mxu0 0.0
          %449 = vmatpush1.msra.mxu0 0.0
          %450 = vmatprep.subr.mxu0 0.0
          %451 = vmatpush1.msra.mxu0 0.0
          %452 = vmatprep.subr.mxu0 0.0
          %453 = vmatpush1.msra.mxu0 0.0
          %454 = vmatprep.subr.mxu0 0.0
          %455 = vmatpush1.msra.mxu0 0.0
          %456 = vmatprep.subr.mxu0 0.0
          %457 = vmatpush1.msra.mxu0 0.0
          %458 = vmatprep.subr.mxu0 0.0
          %459 = vmatpush1.msra.mxu0 0.0
          %460 = vmatprep.subr.mxu0 0.0
          %461 = vmatpush1.msra.mxu0 0.0
          %462 = vmatprep.subr.mxu0 0.0
          %463 = vmatpush1.msra.mxu0 0.0
          %464 = vmatprep.subr.mxu0 0.0
          %465 = vmatpush1.msra.mxu0 0.0
          %466 = vmatprep.subr.mxu0 0.0
          %467 = vmatpush1.msra.mxu0 0.0
          %468 = vmatprep.subr.mxu0 0.0
          %469 = vmatpush1.msra.mxu0 0.0
          %470 = vmatprep.subr.mxu0 0.0
          %471 = vmatpush1.msra.mxu0 0.0
          %472 = vmatprep.subr.mxu0 0.0
          %473 = vmatpush1.msra.mxu0 0.0
          %474 = vmatprep.subr.mxu0 0.0
          %475 = vmatpush1.msra.mxu0 0.0
          %476 = vmatprep.subr.mxu0 0.0
          %477 = vmatpush1.msra.mxu0 0.0
          %478 = vmatprep.subr.mxu0 0.0
          %479 = vmatpush1.msra.mxu0 0.0
          %480 = vmatprep.subr.mxu0 0.0
          %481 = vmatpush1.msra.mxu0 0.0
          %482 = vmatprep.subr.mxu0 0.0
          %483 = vmatpush1.msra.mxu0 0.0
          %484 = vmatprep.subr.mxu0 0.0
          %485 = vmatpush1.msra.mxu0 0.0
          %486 = vmatprep.subr.mxu0 0.0
          %487 = vmatpush1.msra.mxu0 0.0
          %488 = vmatprep.subr.mxu0 0.0
          %489 = vmatpush1.msra.mxu0 0.0
          %490 = vmatprep.subr.mxu0 0.0
          %491 = vmatpush1.msra.mxu0 0.0
          %492 = vmatprep.subr.mxu0 0.0
          %493 = vmatpush1.msra.mxu0 0.0
          %494 = vmatprep.subr.mxu0 0.0
          %495 = vmatpush1.msra.mxu0 0.0
          %496 = vmatprep.subr.mxu0 0.0
          %497 = vmatpush1.msra.mxu0 0.0
          %498 = vmatprep.subr.mxu0 0.0
          %499 = vmatpush1.msra.mxu0 0.0
          %500 = vmatprep.subr.mxu0 0.0
          %501 = vmatpush1.msra.mxu0 0.0
          %502 = vmatprep.subr.mxu0 0.0
          %503 = vmatpush1.msra.mxu0 0.0
          %504 = vmatprep.mubr.f32.mxu0 0.0
          %505 = vmatmul.mubr.f32.gmra.mrb[0].mxu0 %v435
          %v506 = vpop.f32.mrb[0].mxu0
          %v507 = vadd.f32 0.0, %v506
          %v508 = vpop.f32.mrb[0].mxu0
          %509 = vmatprep.mubr.f32.mxu0 0.0
          %510 = vmatmul.mubr.f32.gmra.mrb[0].mxu0 %v438
          %v511 = vpop.f32.mrb[0].mxu0
          %v512 = vadd.f32 0.0, %v511
          %v513 = vpop.f32.mrb[0].mxu0
          %514 = vdwg.mxu0
          %s515 = scalar_lea.vmem [#allocation3], %s345
          %516 = vst.msk [vmem:[%s515] sm:$0xff] %vm349, %v507
          %517 = vst.msk [vmem:[%s515 + $0x8] sm:$0xff] %vm349, %v512
        $region61: #{ca_layer.1} parent=55 // loop_footer
          %s344 = sadd.s32 1, %s340
        $region62: #{ca_layer.1} parent=55 // loop_footer_branch
          %339 = sbr.rel target = $region58
        $region63: #{ca_layer.1} parent=55 // loop_exit
          _
        %v518 = vld [vmem:[#allocation2] sm:$0xff]
        %v519 = vld [vmem:[#allocation2 + $0x8] sm:$0xff]
        %v520 = vld [vmem:[#allocation2 + $0x10] sm:$0xff]
        %v521 = vld [vmem:[#allocation2 + $0x18] sm:$0xff]
        %v522 = vld [vmem:[#allocation2 + $0x20] sm:$0xff]
        %v523 = vld [vmem:[#allocation2 + $0x28] sm:$0xff]
        %v524 = vld [vmem:[#allocation2 + $0x30] sm:$0xff]
        %v525 = vld [vmem:[#allocation2 + $0x38] sm:$0xff]
        %v526 = vld [vmem:[#allocation3] sm:$0xff]
        %v527 = vld [vmem:[#allocation3 + $0x8] sm:$0xff]
        %v528 = vld [vmem:[#allocation3 + $0x10] sm:$0xff]
        %v529 = vld [vmem:[#allocation3 + $0x18] sm:$0xff]
        %v530 = vld [vmem:[#allocation3 + $0x20] sm:$0xff]
        %v531 = vld [vmem:[#allocation3 + $0x28] sm:$0xff]
        %v532 = vld [vmem:[#allocation3 + $0x30] sm:$0xff]
        %v533 = vld [vmem:[#allocation3 + $0x38] sm:$0xff]
        %vm534 = vcmask 130048
        %v536 = vsel %vm534, %v518, 0
        %v539 = vsel %vm534, %v519, 0
        %v542 = vsel %vm534, %v520, 0
        %v545 = vsel %vm534, %v521, 0
        %v548 = vsel %vm534, %v522, 0
        %v551 = vsel %vm534, %v523, 0
        %v554 = vsel %vm534, %v524, 0
        %v557 = vsel %vm534, %v525, 0
        %559 = vmatprep.subr.mxu0 0.0
        %560 = vmatpush1.msra.mxu0 %v335
        %561 = vmatprep.subr.mxu0 0.0
        %562 = vmatpush1.msra.mxu0 %v336
        %563 = vmatprep.subr.mxu0 0.0
        %564 = vmatpush1.msra.mxu0 0.0
        %565 = vmatprep.subr.mxu0 0.0
        %566 = vmatpush1.msra.mxu0 0.0
        %567 = vmatprep.subr.mxu0 0.0
        %568 = vmatpush1.msra.mxu0 0.0
        %569 = vmatprep.subr.mxu0 0.0
        %570 = vmatpush1.msra.mxu0 0.0
        %571 = vmatprep.subr.mxu0 0.0
        %572 = vmatpush1.msra.mxu0 0.0
        %573 = vmatprep.subr.mxu0 0.0
        %574 = vmatpush1.msra.mxu0 0.0
        %575 = vmatprep.subr.mxu0 0.0
        %576 = vmatpush1.msra.mxu0 0.0
        %577 = vmatprep.subr.mxu0 0.0
        %578 = vmatpush1.msra.mxu0 0.0
        %579 = vmatprep.subr.mxu0 0.0
        %580 = vmatpush1.msra.mxu0 0.0
        %581 = vmatprep.subr.mxu0 0.0
        %582 = vmatpush1.msra.mxu0 0.0
        %583 = vmatprep.subr.mxu0 0.0
        %584 = vmatpush1.msra.mxu0 0.0
        %585 = vmatprep.subr.mxu0 0.0
        %586 = vmatpush1.msra.mxu0 0.0
        %587 = vmatprep.subr.mxu0 0.0
        %588 = vmatpush1.msra.mxu0 0.0
        %589 = vmatprep.subr.mxu0 0.0
        %590 = vmatpush1.msra.mxu0 0.0
        %591 = vmatprep.subr.mxu0 0.0
        %592 = vmatpush1.msra.mxu0 0.0
        %593 = vmatprep.subr.mxu0 0.0
        %594 = vmatpush1.msra.mxu0 0.0
        %595 = vmatprep.subr.mxu0 0.0
        %596 = vmatpush1.msra.mxu0 0.0
        %597 = vmatprep.subr.mxu0 0.0
        %598 = vmatpush1.msra.mxu0 0.0
        %599 = vmatprep.subr.mxu0 0.0
        %600 = vmatpush1.msra.mxu0 0.0
        %601 = vmatprep.subr.mxu0 0.0
        %602 = vmatpush1.msra.mxu0 0.0
        %603 = vmatprep.subr.mxu0 0.0
        %604 = vmatpush1.msra.mxu0 0.0
        %605 = vmatprep.subr.mxu0 0.0
        %606 = vmatpush1.msra.mxu0 0.0
        %607 = vmatprep.subr.mxu0 0.0
        %608 = vmatpush1.msra.mxu0 0.0
        %609 = vmatprep.subr.mxu0 0.0
        %610 = vmatpush1.msra.mxu0 0.0
        %611 = vmatprep.subr.mxu0 0.0
        %612 = vmatpush1.msra.mxu0 0.0
        %613 = vmatprep.subr.mxu0 0.0
        %614 = vmatpush1.msra.mxu0 0.0
        %615 = vmatprep.subr.mxu0 0.0
        %616 = vmatpush1.msra.mxu0 0.0
        %617 = vmatprep.subr.mxu0 0.0
        %618 = vmatpush1.msra.mxu0 0.0
        %619 = vmatprep.subr.mxu0 0.0
        %620 = vmatpush1.msra.mxu0 0.0
        %621 = vmatprep.subr.mxu0 0.0
        %622 = vmatpush1.msra.mxu0 0.0
        %623 = vmatprep.mubr.f32.mxu0 0.0
        %624 = vmatmul.mubr.f32.gmra.mrb[0].mxu0 %v536
        %v625 = vpop.f32.mrb[0].mxu0
        %v626 = vadd.f32 0.0, %v625
        %v627 = vpop.f32.mrb[0].mxu0
        %628 = vmatprep.mubr.f32.mxu0 0.0
        %629 = vmatmul.mubr.f32.gmra.mrb[0].mxu0 %v539
        %v630 = vpop.f32.mrb[0].mxu0
        %v631 = vadd.f32 0.0, %v630
        %v632 = vpop.f32.mrb[0].mxu0
        %633 = vmatprep.mubr.f32.mxu0 0.0
        %634 = vmatmul.mubr.f32.gmra.mrb[0].mxu0 %v542
        %v635 = vpop.f32.mrb[0].mxu0
        %v636 = vadd.f32 0.0, %v635
        %v637 = vpop.f32.mrb[0].mxu0
        %638 = vmatprep.mubr.f32.mxu0 0.0
        %639 = vmatmul.mubr.f32.gmra.mrb[0].mxu0 %v545
        %v640 = vpop.f32.mrb[0].mxu0
        %v641 = vadd.f32 0.0, %v640
        %v642 = vpop.f32.mrb[0].mxu0
        %643 = vmatprep.mubr.f32.mxu0 0.0
        %644 = vmatmul.mubr.f32.gmra.mrb[0].mxu0 %v548
        %v645 = vpop.f32.mrb[0].mxu0
        %v646 = vadd.f32 0.0, %v645
        %v647 = vpop.f32.mrb[0].mxu0
        %648 = vmatprep.mubr.f32.mxu0 0.0
        %649 = vmatmul.mubr.f32.gmra.mrb[0].mxu0 %v551
        %v650 = vpop.f32.mrb[0].mxu0
        %v651 = vadd.f32 0.0, %v650
        %v652 = vpop.f32.mrb[0].mxu0
        %653 = vmatprep.mubr.f32.mxu0 0.0
        %654 = vmatmul.mubr.f32.gmra.mrb[0].mxu0 %v554
        %v655 = vpop.f32.mrb[0].mxu0
        %v656 = vadd.f32 0.0, %v655
        %v657 = vpop.f32.mrb[0].mxu0
        %658 = vmatprep.mubr.f32.mxu0 0.0
        %659 = vmatmul.mubr.f32.gmra.mrb[0].mxu0 %v557
        %v660 = vpop.f32.mrb[0].mxu0
        %v661 = vadd.f32 0.0, %v660
        %v662 = vpop.f32.mrb[0].mxu0
        %663 = vdwg.mxu0
        %v665 = vsel %vm534, %v526, 0
        %v668 = vsel %vm534, %v527, 0
        %v671 = vsel %vm534, %v528, 0
        %v674 = vsel %vm534, %v529, 0
        %v677 = vsel %vm534, %v530, 0
        %v680 = vsel %vm534, %v531, 0
        %v683 = vsel %vm534, %v532, 0
        %v686 = vsel %vm534, %v533, 0
        %688 = vmatprep.subr.mxu0 0.0
        %689 = vmatpush1.msra.mxu0 %v337
        %690 = vmatprep.subr.mxu0 0.0
        %691 = vmatpush1.msra.mxu0 %v338
        %692 = vmatprep.subr.mxu0 0.0
        %693 = vmatpush1.msra.mxu0 0.0
        %694 = vmatprep.subr.mxu0 0.0
        %695 = vmatpush1.msra.mxu0 0.0
        %696 = vmatprep.subr.mxu0 0.0
        %697 = vmatpush1.msra.mxu0 0.0
        %698 = vmatprep.subr.mxu0 0.0
        %699 = vmatpush1.msra.mxu0 0.0
        %700 = vmatprep.subr.mxu0 0.0
        %701 = vmatpush1.msra.mxu0 0.0
        %702 = vmatprep.subr.mxu0 0.0
        %703 = vmatpush1.msra.mxu0 0.0
        %704 = vmatprep.subr.mxu0 0.0
        %705 = vmatpush1.msra.mxu0 0.0
        %706 = vmatprep.subr.mxu0 0.0
        %707 = vmatpush1.msra.mxu0 0.0
        %708 = vmatprep.subr.mxu0 0.0
        %709 = vmatpush1.msra.mxu0 0.0
        %710 = vmatprep.subr.mxu0 0.0
        %711 = vmatpush1.msra.mxu0 0.0
        %712 = vmatprep.subr.mxu0 0.0
        %713 = vmatpush1.msra.mxu0 0.0
        %714 = vmatprep.subr.mxu0 0.0
        %715 = vmatpush1.msra.mxu0 0.0
        %716 = vmatprep.subr.mxu0 0.0
        %717 = vmatpush1.msra.mxu0 0.0
        %718 = vmatprep.subr.mxu0 0.0
        %719 = vmatpush1.msra.mxu0 0.0
        %720 = vmatprep.subr.mxu0 0.0
        %721 = vmatpush1.msra.mxu0 0.0
        %722 = vmatprep.subr.mxu0 0.0
        %723 = vmatpush1.msra.mxu0 0.0
        %724 = vmatprep.subr.mxu0 0.0
        %725 = vmatpush1.msra.mxu0 0.0
        %726 = vmatprep.subr.mxu0 0.0
        %727 = vmatpush1.msra.mxu0 0.0
        %728 = vmatprep.subr.mxu0 0.0
        %729 = vmatpush1.msra.mxu0 0.0
        %730 = vmatprep.subr.mxu0 0.0
        %731 = vmatpush1.msra.mxu0 0.0
        %732 = vmatprep.subr.mxu0 0.0
        %733 = vmatpush1.msra.mxu0 0.0
        %734 = vmatprep.subr.mxu0 0.0
        %735 = vmatpush1.msra.mxu0 0.0
        %736 = vmatprep.subr.mxu0 0.0
        %737 = vmatpush1.msra.mxu0 0.0
        %738 = vmatprep.subr.mxu0 0.0
        %739 = vmatpush1.msra.mxu0 0.0
        %740 = vmatprep.subr.mxu0 0.0
        %741 = vmatpush1.msra.mxu0 0.0
        %742 = vmatprep.subr.mxu0 0.0
        %743 = vmatpush1.msra.mxu0 0.0
        %744 = vmatprep.subr.mxu0 0.0
        %745 = vmatpush1.msra.mxu0 0.0
        %746 = vmatprep.subr.mxu0 0.0
        %747 = vmatpush1.msra.mxu0 0.0
        %748 = vmatprep.subr.mxu0 0.0
        %749 = vmatpush1.msra.mxu0 0.0
        %750 = vmatprep.subr.mxu0 0.0
        %751 = vmatpush1.msra.mxu0 0.0
        %752 = vmatprep.mubr.f32.mxu0 0.0
        %753 = vmatmul.mubr.f32.gmra.mrb[0].mxu0 %v665
        %v754 = vpop.f32.mrb[0].mxu0
        %v755 = vadd.f32 0.0, %v754
        %v756 = vpop.f32.mrb[0].mxu0
        %757 = vmatprep.mubr.f32.mxu0 0.0
        %758 = vmatmul.mubr.f32.gmra.mrb[0].mxu0 %v668
        %v759 = vpop.f32.mrb[0].mxu0
        %v760 = vadd.f32 0.0, %v759
        %v761 = vpop.f32.mrb[0].mxu0
        %762 = vmatprep.mubr.f32.mxu0 0.0
        %763 = vmatmul.mubr.f32.gmra.mrb[0].mxu0 %v671
        %v764 = vpop.f32.mrb[0].mxu0
        %v765 = vadd.f32 0.0, %v764
        %v766 = vpop.f32.mrb[0].mxu0
        %767 = vmatprep.mubr.f32.mxu0 0.0
        %768 = vmatmul.mubr.f32.gmra.mrb[0].mxu0 %v674
        %v769 = vpop.f32.mrb[0].mxu0
        %v770 = vadd.f32 0.0, %v769
        %v771 = vpop.f32.mrb[0].mxu0
        %772 = vmatprep.mubr.f32.mxu0 0.0
        %773 = vmatmul.mubr.f32.gmra.mrb[0].mxu0 %v677
        %v774 = vpop.f32.mrb[0].mxu0
        %v775 = vadd.f32 0.0, %v774
        %v776 = vpop.f32.mrb[0].mxu0
        %777 = vmatprep.mubr.f32.mxu0 0.0
        %778 = vmatmul.mubr.f32.gmra.mrb[0].mxu0 %v680
        %v779 = vpop.f32.mrb[0].mxu0
        %v780 = vadd.f32 0.0, %v779
        %v781 = vpop.f32.mrb[0].mxu0
        %782 = vmatprep.mubr.f32.mxu0 0.0
        %783 = vmatmul.mubr.f32.gmra.mrb[0].mxu0 %v683
        %v784 = vpop.f32.mrb[0].mxu0
        %v785 = vadd.f32 0.0, %v784
        %v786 = vpop.f32.mrb[0].mxu0
        %787 = vmatprep.mubr.f32.mxu0 0.0
        %788 = vmatmul.mubr.f32.gmra.mrb[0].mxu0 %v686
        %v789 = vpop.f32.mrb[0].mxu0
        %v790 = vadd.f32 0.0, %v789
        %v791 = vpop.f32.mrb[0].mxu0
        %792 = vdwg.mxu0
        %v793 = vsub.f32 %v626, %v755
        %v794 = vsub.f32 %v631, %v760
        %v795 = vsub.f32 %v636, %v765
        %v796 = vsub.f32 %v641, %v770
        %v797 = vsub.f32 %v646, %v775
        %v798 = vsub.f32 %v651, %v780
        %v799 = vsub.f32 %v656, %v785
        %v800 = vsub.f32 %v661, %v790
        %801 = vmatprep.subr.mxu0 0.0
        %802 = vmatpush1.msra.mxu0 %v335
        %803 = vmatprep.subr.mxu0 0.0
        %804 = vmatpush1.msra.mxu0 %v336
        %805 = vmatprep.subr.mxu0 0.0
        %806 = vmatpush1.msra.mxu0 0.0
        %807 = vmatprep.subr.mxu0 0.0
        %808 = vmatpush1.msra.mxu0 0.0
        %809 = vmatprep.subr.mxu0 0.0
        %810 = vmatpush1.msra.mxu0 0.0
        %811 = vmatprep.subr.mxu0 0.0
        %812 = vmatpush1.msra.mxu0 0.0
        %813 = vmatprep.subr.mxu0 0.0
        %814 = vmatpush1.msra.mxu0 0.0
        %815 = vmatprep.subr.mxu0 0.0
        %816 = vmatpush1.msra.mxu0 0.0
        %817 = vmatprep.subr.mxu0 0.0
        %818 = vmatpush1.msra.mxu0 0.0
        %819 = vmatprep.subr.mxu0 0.0
        %820 = vmatpush1.msra.mxu0 0.0
        %821 = vmatprep.subr.mxu0 0.0
        %822 = vmatpush1.msra.mxu0 0.0
        %823 = vmatprep.subr.mxu0 0.0
        %824 = vmatpush1.msra.mxu0 0.0
        %825 = vmatprep.subr.mxu0 0.0
        %826 = vmatpush1.msra.mxu0 0.0
        %827 = vmatprep.subr.mxu0 0.0
        %828 = vmatpush1.msra.mxu0 0.0
        %829 = vmatprep.subr.mxu0 0.0
        %830 = vmatpush1.msra.mxu0 0.0
        %831 = vmatprep.subr.mxu0 0.0
        %832 = vmatpush1.msra.mxu0 0.0
        %833 = vmatprep.subr.mxu0 0.0
        %834 = vmatpush1.msra.mxu0 0.0
        %835 = vmatprep.subr.mxu0 0.0
        %836 = vmatpush1.msra.mxu0 0.0
        %837 = vmatprep.subr.mxu0 0.0
        %838 = vmatpush1.msra.mxu0 0.0
        %839 = vmatprep.subr.mxu0 0.0
        %840 = vmatpush1.msra.mxu0 0.0
        %841 = vmatprep.subr.mxu0 0.0
        %842 = vmatpush1.msra.mxu0 0.0
        %843 = vmatprep.subr.mxu0 0.0
        %844 = vmatpush1.msra.mxu0 0.0
        %845 = vmatprep.subr.mxu0 0.0
        %846 = vmatpush1.msra.mxu0 0.0
        %847 = vmatprep.subr.mxu0 0.0
        %848 = vmatpush1.msra.mxu0 0.0
        %849 = vmatprep.subr.mxu0 0.0
        %850 = vmatpush1.msra.mxu0 0.0
        %851 = vmatprep.subr.mxu0 0.0
        %852 = vmatpush1.msra.mxu0 0.0
        %853 = vmatprep.subr.mxu0 0.0
        %854 = vmatpush1.msra.mxu0 0.0
        %855 = vmatprep.subr.mxu0 0.0
        %856 = vmatpush1.msra.mxu0 0.0
        %857 = vmatprep.subr.mxu0 0.0
        %858 = vmatpush1.msra.mxu0 0.0
        %859 = vmatprep.subr.mxu0 0.0
        %860 = vmatpush1.msra.mxu0 0.0
        %861 = vmatprep.subr.mxu0 0.0
        %862 = vmatpush1.msra.mxu0 0.0
        %863 = vmatprep.subr.mxu0 0.0
        %864 = vmatpush1.msra.mxu0 0.0
        %865 = vmatprep.mubr.f32.mxu0 0.0
        %866 = vmatmul.mubr.f32.gmra.mrb[0].mxu0 %v665
        %v867 = vpop.f32.mrb[0].mxu0
        %v868 = vadd.f32 0.0, %v867
        %v869 = vpop.f32.mrb[0].mxu0
        %870 = vmatprep.mubr.f32.mxu0 0.0
        %871 = vmatmul.mubr.f32.gmra.mrb[0].mxu0 %v668
        %v872 = vpop.f32.mrb[0].mxu0
        %v873 = vadd.f32 0.0, %v872
        %v874 = vpop.f32.mrb[0].mxu0
        %875 = vmatprep.mubr.f32.mxu0 0.0
        %876 = vmatmul.mubr.f32.gmra.mrb[0].mxu0 %v671
        %v877 = vpop.f32.mrb[0].mxu0
        %v878 = vadd.f32 0.0, %v877
        %v879 = vpop.f32.mrb[0].mxu0
        %880 = vmatprep.mubr.f32.mxu0 0.0
        %881 = vmatmul.mubr.f32.gmra.mrb[0].mxu0 %v674
        %v882 = vpop.f32.mrb[0].mxu0
        %v883 = vadd.f32 0.0, %v882
        %v884 = vpop.f32.mrb[0].mxu0
        %885 = vmatprep.mubr.f32.mxu0 0.0
        %886 = vmatmul.mubr.f32.gmra.mrb[0].mxu0 %v677
        %v887 = vpop.f32.mrb[0].mxu0
        %v888 = vadd.f32 0.0, %v887
        %v889 = vpop.f32.mrb[0].mxu0
        %890 = vmatprep.mubr.f32.mxu0 0.0
        %891 = vmatmul.mubr.f32.gmra.mrb[0].mxu0 %v680
        %v892 = vpop.f32.mrb[0].mxu0
        %v893 = vadd.f32 0.0, %v892
        %v894 = vpop.f32.mrb[0].mxu0
        %895 = vmatprep.mubr.f32.mxu0 0.0
        %896 = vmatmul.mubr.f32.gmra.mrb[0].mxu0 %v683
        %v897 = vpop.f32.mrb[0].mxu0
        %v898 = vadd.f32 0.0, %v897
        %v899 = vpop.f32.mrb[0].mxu0
        %900 = vmatprep.mubr.f32.mxu0 0.0
        %901 = vmatmul.mubr.f32.gmra.mrb[0].mxu0 %v686
        %v902 = vpop.f32.mrb[0].mxu0
        %v903 = vadd.f32 0.0, %v902
        %v904 = vpop.f32.mrb[0].mxu0
        %905 = vdwg.mxu0
        %906 = vmatprep.subr.mxu0 0.0
        %907 = vmatpush1.msra.mxu0 %v337
        %908 = vmatprep.subr.mxu0 0.0
        %909 = vmatpush1.msra.mxu0 %v338
        %910 = vmatprep.subr.mxu0 0.0
        %911 = vmatpush1.msra.mxu0 0.0
        %912 = vmatprep.subr.mxu0 0.0
        %913 = vmatpush1.msra.mxu0 0.0
        %914 = vmatprep.subr.mxu0 0.0
        %915 = vmatpush1.msra.mxu0 0.0
        %916 = vmatprep.subr.mxu0 0.0
        %917 = vmatpush1.msra.mxu0 0.0
        %918 = vmatprep.subr.mxu0 0.0
        %919 = vmatpush1.msra.mxu0 0.0
        %920 = vmatprep.subr.mxu0 0.0
        %921 = vmatpush1.msra.mxu0 0.0
        %922 = vmatprep.subr.mxu0 0.0
        %923 = vmatpush1.msra.mxu0 0.0
        %924 = vmatprep.subr.mxu0 0.0
        %925 = vmatpush1.msra.mxu0 0.0
        %926 = vmatprep.subr.mxu0 0.0
        %927 = vmatpush1.msra.mxu0 0.0
        %928 = vmatprep.subr.mxu0 0.0
        %929 = vmatpush1.msra.mxu0 0.0
        %930 = vmatprep.subr.mxu0 0.0
        %931 = vmatpush1.msra.mxu0 0.0
        %932 = vmatprep.subr.mxu0 0.0
        %933 = vmatpush1.msra.mxu0 0.0
        %934 = vmatprep.subr.mxu0 0.0
        %935 = vmatpush1.msra.mxu0 0.0
        %936 = vmatprep.subr.mxu0 0.0
        %937 = vmatpush1.msra.mxu0 0.0
        %938 = vmatprep.subr.mxu0 0.0
        %939 = vmatpush1.msra.mxu0 0.0
        %940 = vmatprep.subr.mxu0 0.0
        %941 = vmatpush1.msra.mxu0 0.0
        %942 = vmatprep.subr.mxu0 0.0
        %943 = vmatpush1.msra.mxu0 0.0
        %944 = vmatprep.subr.mxu0 0.0
        %945 = vmatpush1.msra.mxu0 0.0
        %946 = vmatprep.subr.mxu0 0.0
        %947 = vmatpush1.msra.mxu0 0.0
        %948 = vmatprep.subr.mxu0 0.0
        %949 = vmatpush1.msra.mxu0 0.0
        %950 = vmatprep.subr.mxu0 0.0
        %951 = vmatpush1.msra.mxu0 0.0
        %952 = vmatprep.subr.mxu0 0.0
        %953 = vmatpush1.msra.mxu0 0.0
        %954 = vmatprep.subr.mxu0 0.0
        %955 = vmatpush1.msra.mxu0 0.0
        %956 = vmatprep.subr.mxu0 0.0
        %957 = vmatpush1.msra.mxu0 0.0
        %958 = vmatprep.subr.mxu0 0.0
        %959 = vmatpush1.msra.mxu0 0.0
        %960 = vmatprep.subr.mxu0 0.0
        %961 = vmatpush1.msra.mxu0 0.0
        %962 = vmatprep.subr.mxu0 0.0
        %963 = vmatpush1.msra.mxu0 0.0
        %964 = vmatprep.subr.mxu0 0.0
        %965 = vmatpush1.msra.mxu0 0.0
        %966 = vmatprep.subr.mxu0 0.0
        %967 = vmatpush1.msra.mxu0 0.0
        %968 = vmatprep.subr.mxu0 0.0
        %969 = vmatpush1.msra.mxu0 0.0
        %970 = vmatprep.mubr.f32.mxu0 0.0
        %971 = vmatmul.mubr.f32.gmra.mrb[0].mxu0 %v536
        %v972 = vpop.f32.mrb[0].mxu0
        %v973 = vadd.f32 %v868, %v972
        %v974 = vpop.f32.mrb[0].mxu0
        %975 = vmatprep.mubr.f32.mxu0 0.0
        %976 = vmatmul.mubr.f32.gmra.mrb[0].mxu0 %v539
        %v977 = vpop.f32.mrb[0].mxu0
        %v978 = vadd.f32 %v873, %v977
        %v979 = vpop.f32.mrb[0].mxu0
        %980 = vmatprep.mubr.f32.mxu0 0.0
        %981 = vmatmul.mubr.f32.gmra.mrb[0].mxu0 %v542
        %v982 = vpop.f32.mrb[0].mxu0
        %v983 = vadd.f32 %v878, %v982
        %v984 = vpop.f32.mrb[0].mxu0
        %985 = vmatprep.mubr.f32.mxu0 0.0
        %986 = vmatmul.mubr.f32.gmra.mrb[0].mxu0 %v545
        %v987 = vpop.f32.mrb[0].mxu0
        %v988 = vadd.f32 %v883, %v987
        %v989 = vpop.f32.mrb[0].mxu0
        %990 = vmatprep.mubr.f32.mxu0 0.0
        %991 = vmatmul.mubr.f32.gmra.mrb[0].mxu0 %v548
        %v992 = vpop.f32.mrb[0].mxu0
        %v993 = vadd.f32 %v888, %v992
        %v994 = vpop.f32.mrb[0].mxu0
        %995 = vmatprep.mubr.f32.mxu0 0.0
        %996 = vmatmul.mubr.f32.gmra.mrb[0].mxu0 %v551
        %v997 = vpop.f32.mrb[0].mxu0
        %v998 = vadd.f32 %v893, %v997
        %v999 = vpop.f32.mrb[0].mxu0
        %1000 = vmatprep.mubr.f32.mxu0 0.0
        %1001 = vmatmul.mubr.f32.gmra.mrb[0].mxu0 %v554
        %v1002 = vpop.f32.mrb[0].mxu0
        %v1003 = vadd.f32 %v898, %v1002
        %v1004 = vpop.f32.mrb[0].mxu0
        %1005 = vmatprep.mubr.f32.mxu0 0.0
        %1006 = vmatmul.mubr.f32.gmra.mrb[0].mxu0 %v557
        %v1007 = vpop.f32.mrb[0].mxu0
        %v1008 = vadd.f32 %v903, %v1007
        %v1009 = vpop.f32.mrb[0].mxu0
        %1010 = vdwg.mxu0
        %v1011 = vmul.f32 %v793, %v793
        %v1012 = vmul.f32 %v794, %v794
        %v1013 = vmul.f32 %v795, %v795
        %v1014 = vmul.f32 %v796, %v796
        %v1015 = vmul.f32 %v797, %v797
        %v1016 = vmul.f32 %v798, %v798
        %v1017 = vmul.f32 %v799, %v799
        %v1018 = vmul.f32 %v800, %v800
        %v1019 = vmul.f32 %v973, %v973
        %v1020 = vmul.f32 %v978, %v978
        %v1021 = vmul.f32 %v983, %v983
        %v1022 = vmul.f32 %v988, %v988
        %v1023 = vmul.f32 %v993, %v993
        %v1024 = vmul.f32 %v998, %v998
        %v1025 = vmul.f32 %v1003, %v1003
        %v1026 = vmul.f32 %v1008, %v1008
        %v1027 = vadd.f32 %v1011, %v1019
        %v1028 = vadd.f32 %v1012, %v1020
        %v1029 = vadd.f32 %v1013, %v1021
        %v1030 = vadd.f32 %v1014, %v1022
        %v1031 = vadd.f32 %v1015, %v1023
        %v1032 = vadd.f32 %v1016, %v1024
        %v1033 = vadd.f32 %v1017, %v1025
        %v1034 = vadd.f32 %v1018, %v1026
        %v1035 = vrsqrt.pop %v1027
        %v1036 = vmul.f32 %v1027, %v1035
        %vm1037 = vcmp.eq.f32.partialorder %v1027, inf
        %v1038 = vsel %vm1037, %v1027, %v1036
        %vm1039 = vcmp.eq.f32.partialorder %v1027, 0.0
        %v1040 = vand.u32 %v1027, 2147483648
        %v1041 = vsel %vm1039, %v1040, %v1038
        %v1042 = vrsqrt.pop %v1028
        %v1043 = vmul.f32 %v1028, %v1042
        %vm1044 = vcmp.eq.f32.partialorder %v1028, inf
        %v1045 = vsel %vm1044, %v1028, %v1043
        %vm1046 = vcmp.eq.f32.partialorder %v1028, 0.0
        %v1047 = vand.u32 %v1028, 2147483648
        %v1048 = vsel %vm1046, %v1047, %v1045
        %v1049 = vrsqrt.pop %v1029
        %v1050 = vmul.f32 %v1029, %v1049
        %vm1051 = vcmp.eq.f32.partialorder %v1029, inf
        %v1052 = vsel %vm1051, %v1029, %v1050
        %vm1053 = vcmp.eq.f32.partialorder %v1029, 0.0
        %v1054 = vand.u32 %v1029, 2147483648
        %v1055 = vsel %vm1053, %v1054, %v1052
        %v1056 = vrsqrt.pop %v1030
        %v1057 = vmul.f32 %v1030, %v1056
        %vm1058 = vcmp.eq.f32.partialorder %v1030, inf
        %v1059 = vsel %vm1058, %v1030, %v1057
        %vm1060 = vcmp.eq.f32.partialorder %v1030, 0.0
        %v1061 = vand.u32 %v1030, 2147483648
        %v1062 = vsel %vm1060, %v1061, %v1059
        %v1063 = vrsqrt.pop %v1031
        %v1064 = vmul.f32 %v1031, %v1063
        %vm1065 = vcmp.eq.f32.partialorder %v1031, inf
        %v1066 = vsel %vm1065, %v1031, %v1064
        %vm1067 = vcmp.eq.f32.partialorder %v1031, 0.0
        %v1068 = vand.u32 %v1031, 2147483648
        %v1069 = vsel %vm1067, %v1068, %v1066
        %v1070 = vrsqrt.pop %v1032
        %v1071 = vmul.f32 %v1032, %v1070
        %vm1072 = vcmp.eq.f32.partialorder %v1032, inf
        %v1073 = vsel %vm1072, %v1032, %v1071
        %vm1074 = vcmp.eq.f32.partialorder %v1032, 0.0
        %v1075 = vand.u32 %v1032, 2147483648
        %v1076 = vsel %vm1074, %v1075, %v1073
        %v1077 = vrsqrt.pop %v1033
        %v1078 = vmul.f32 %v1033, %v1077
        %vm1079 = vcmp.eq.f32.partialorder %v1033, inf
        %v1080 = vsel %vm1079, %v1033, %v1078
        %vm1081 = vcmp.eq.f32.partialorder %v1033, 0.0
        %v1082 = vand.u32 %v1033, 2147483648
        %v1083 = vsel %vm1081, %v1082, %v1080
        %v1084 = vrsqrt.pop %v1034
        %v1085 = vmul.f32 %v1034, %v1084
        %vm1086 = vcmp.eq.f32.partialorder %v1034, inf
        %v1087 = vsel %vm1086, %v1034, %v1085
        %vm1088 = vcmp.eq.f32.partialorder %v1034, 0.0
        %v1089 = vand.u32 %v1034, 2147483648
        %v1090 = vsel %vm1088, %v1089, %v1087
        %1091 = vadd.xlane.f32.xlu0 %v1041
        %v1092 = vpop.xlane.xlu0 %1091
        %1093 = vadd.xlane.f32.xlu0 %v1048
        %v1094 = vpop.xlane.xlu0 %1093
        %1095 = vadd.xlane.f32.xlu0 %v1055
        %v1096 = vpop.xlane.xlu0 %1095
        %1097 = vadd.xlane.f32.xlu0 %v1062
        %v1098 = vpop.xlane.xlu0 %1097
        %1099 = vadd.xlane.f32.xlu0 %v1069
        %v1100 = vpop.xlane.xlu0 %1099
        %1101 = vadd.xlane.f32.xlu0 %v1076
        %v1102 = vpop.xlane.xlu0 %1101
        %1103 = vadd.xlane.f32.xlu0 %v1083
        %v1104 = vpop.xlane.xlu0 %1103
        %1105 = vadd.xlane.f32.xlu0 %v1090
        %v1106 = vpop.xlane.xlu0 %1105
        %v1115 = vlaneseq
        %v1116 = vand.u32 %v1115, 127
        %v1117 = vlaneseq
        %v1118 = vshrl.u32 %v1117, 7
        %v1119 = vsub.s32 %v1116, %v1118
        %v1120 = vrot.slane %v1092, %v1119
        %v1121 = vadd.s32 %v1116, 4294967288
        %v1122 = vlaneseq
        %v1123 = vshrl.u32 %v1122, 7
        %v1124 = vsub.s32 %v1121, %v1123
        %v1125 = vrot.slane %v1094, %v1124
        %vm1126 = vcmask 130112
        %v1127 = vsel %vm1126, %v1125, %v1120
        %v1128 = vlaneseq
        %v1129 = vshrl.u32 %v1128, 7
        %v1130 = vsub.s32 %v1116, %v1129
        %v1131 = vrot.slane %v1096, %v1130
        %v1132 = vlaneseq
        %v1133 = vshrl.u32 %v1132, 7
        %v1134 = vsub.s32 %v1121, %v1133
        %v1135 = vrot.slane %v1098, %v1134
        %v1136 = vsel %vm1126, %v1135, %v1131
        %v1137 = vlaneseq
        %v1138 = vshrl.u32 %v1137, 7
        %v1139 = vsub.s32 %v1116, %v1138
        %v1140 = vrot.slane %v1100, %v1139
        %v1141 = vlaneseq
        %v1142 = vshrl.u32 %v1141, 7
        %v1143 = vsub.s32 %v1121, %v1142
        %v1144 = vrot.slane %v1102, %v1143
        %v1145 = vsel %vm1126, %v1144, %v1140
        %v1146 = vlaneseq
        %v1147 = vshrl.u32 %v1146, 7
        %v1148 = vsub.s32 %v1116, %v1147
        %v1149 = vrot.slane %v1104, %v1148
        %v1150 = vlaneseq
        %v1151 = vshrl.u32 %v1150, 7
        %v1152 = vsub.s32 %v1121, %v1151
        %v1153 = vrot.slane %v1106, %v1152
        %v1154 = vsel %vm1126, %v1153, %v1149
        %vm1155 = vcmask 1041409
        %v1156 = vsel %vm1155, %v1136, %v1127
        %vm1157 = vcmask 1042434
        %v1158 = vsel %vm1157, %v1145, %v1156
        %vm1159 = vcmask 1043459
        %v1160 = vsel %vm1159, %v1154, %v1158
        %vm1162 = vcmask 125952
        %v1163 = vsel %vm1162, %v1160, 0.0
        %1164 = vadd.xlane.f32.xlu0 %v1163
        %v1165 = vpop.xlane.xlu0 %1164
        %v1166 = vld [vmem:[%s5] sm:$0xf]
        %v1167 = vld [vmem:[%s6] sm:$0xf]
        %vm1168 = vcmask 31744
        %v1170 = vsel %vm1168, %v1166, 0
        %vm1172 = vcmask 1043456
        %v1174 = vsel %vm1172, %v1165, 0
        %1176 = vmatprep.subr.mxu0 0.0
        %1177 = vmatpush1.msra.mxu0 %v1174
        %1178 = vmatprep.subr.mxu0 0.0
        %1179 = vmatpush1.msra.mxu0 0.0
        %1180 = vmatprep.subr.mxu0 0.0
        %1181 = vmatpush1.msra.mxu0 0.0
        %1182 = vmatprep.subr.mxu0 0.0
        %1183 = vmatpush1.msra.mxu0 0.0
        %1184 = vmatprep.subr.mxu0 0.0
        %1185 = vmatpush1.msra.mxu0 0.0
        %1186 = vmatprep.subr.mxu0 0.0
        %1187 = vmatpush1.msra.mxu0 0.0
        %1188 = vmatprep.subr.mxu0 0.0
        %1189 = vmatpush1.msra.mxu0 0.0
        %1190 = vmatprep.subr.mxu0 0.0
        %1191 = vmatpush1.msra.mxu0 0.0
        %1192 = vmatprep.subr.mxu0 0.0
        %1193 = vmatpush1.msra.mxu0 0.0
        %1194 = vmatprep.subr.mxu0 0.0
        %1195 = vmatpush1.msra.mxu0 0.0
        %1196 = vmatprep.subr.mxu0 0.0
        %1197 = vmatpush1.msra.mxu0 0.0
        %1198 = vmatprep.subr.mxu0 0.0
        %1199 = vmatpush1.msra.mxu0 0.0
        %1200 = vmatprep.subr.mxu0 0.0
        %1201 = vmatpush1.msra.mxu0 0.0
        %1202 = vmatprep.subr.mxu0 0.0
        %1203 = vmatpush1.msra.mxu0 0.0
        %1204 = vmatprep.subr.mxu0 0.0
        %1205 = vmatpush1.msra.mxu0 0.0
        %1206 = vmatprep.subr.mxu0 0.0
        %1207 = vmatpush1.msra.mxu0 0.0
        %1208 = vmatprep.subr.mxu0 0.0
        %1209 = vmatpush1.msra.mxu0 0.0
        %1210 = vmatprep.subr.mxu0 0.0
        %1211 = vmatpush1.msra.mxu0 0.0
        %1212 = vmatprep.subr.mxu0 0.0
        %1213 = vmatpush1.msra.mxu0 0.0
        %1214 = vmatprep.subr.mxu0 0.0
        %1215 = vmatpush1.msra.mxu0 0.0
        %1216 = vmatprep.subr.mxu0 0.0
        %1217 = vmatpush1.msra.mxu0 0.0
        %1218 = vmatprep.subr.mxu0 0.0
        %1219 = vmatpush1.msra.mxu0 0.0
        %1220 = vmatprep.subr.mxu0 0.0
        %1221 = vmatpush1.msra.mxu0 0.0
        %1222 = vmatprep.subr.mxu0 0.0
        %1223 = vmatpush1.msra.mxu0 0.0
        %1224 = vmatprep.subr.mxu0 0.0
        %1225 = vmatpush1.msra.mxu0 0.0
        %1226 = vmatprep.subr.mxu0 0.0
        %1227 = vmatpush1.msra.mxu0 0.0
        %1228 = vmatprep.subr.mxu0 0.0
        %1229 = vmatpush1.msra.mxu0 0.0
        %1230 = vmatprep.subr.mxu0 0.0
        %1231 = vmatpush1.msra.mxu0 0.0
        %1232 = vmatprep.subr.mxu0 0.0
        %1233 = vmatpush1.msra.mxu0 0.0
        %1234 = vmatprep.subr.mxu0 0.0
        %1235 = vmatpush1.msra.mxu0 0.0
        %1236 = vmatprep.subr.mxu0 0.0
        %1237 = vmatpush1.msra.mxu0 0.0
        %1238 = vmatprep.subr.mxu0 0.0
        %1239 = vmatpush1.msra.mxu0 0.0
        %1240 = vmatprep.mubr.f32.mxu0 0.0
        %1241 = vmatmul.mubr.f32.gmra.mrb[0].mxu0 %v1170
        %v1242 = vpop.f32.mrb[0].mxu0
        %v1243 = vadd.f32 %v1167, %v1242
        %v1244 = vpop.f32.mrb[0].mxu0
        %1245 = vdwg.mxu0
        %v1246 = vmax.f32 %v1243, 0.0
        %v1247 = vld [vmem:[%s7] sm:$0xf]
        %v1248 = vld [vmem:[%s8] sm:$0xf]
        %v1250 = vsel %vm1168, %v1247, 0
        %v1253 = vsel %vm1172, %v1246, 0
        %1255 = vmatprep.subr.mxu0 0.0
        %1256 = vmatpush1.msra.mxu0 %v1253
        %1257 = vmatprep.subr.mxu0 0.0
        %1258 = vmatpush1.msra.mxu0 0.0
        %1259 = vmatprep.subr.mxu0 0.0
        %1260 = vmatpush1.msra.mxu0 0.0
        %1261 = vmatprep.subr.mxu0 0.0
        %1262 = vmatpush1.msra.mxu0 0.0
        %1263 = vmatprep.subr.mxu0 0.0
        %1264 = vmatpush1.msra.mxu0 0.0
        %1265 = vmatprep.subr.mxu0 0.0
        %1266 = vmatpush1.msra.mxu0 0.0
        %1267 = vmatprep.subr.mxu0 0.0
        %1268 = vmatpush1.msra.mxu0 0.0
        %1269 = vmatprep.subr.mxu0 0.0
        %1270 = vmatpush1.msra.mxu0 0.0
        %1271 = vmatprep.subr.mxu0 0.0
        %1272 = vmatpush1.msra.mxu0 0.0
        %1273 = vmatprep.subr.mxu0 0.0
        %1274 = vmatpush1.msra.mxu0 0.0
        %1275 = vmatprep.subr.mxu0 0.0
        %1276 = vmatpush1.msra.mxu0 0.0
        %1277 = vmatprep.subr.mxu0 0.0
        %1278 = vmatpush1.msra.mxu0 0.0
        %1279 = vmatprep.subr.mxu0 0.0
        %1280 = vmatpush1.msra.mxu0 0.0
        %1281 = vmatprep.subr.mxu0 0.0
        %1282 = vmatpush1.msra.mxu0 0.0
        %1283 = vmatprep.subr.mxu0 0.0
        %1284 = vmatpush1.msra.mxu0 0.0
        %1285 = vmatprep.subr.mxu0 0.0
        %1286 = vmatpush1.msra.mxu0 0.0
        %1287 = vmatprep.subr.mxu0 0.0
        %1288 = vmatpush1.msra.mxu0 0.0
        %1289 = vmatprep.subr.mxu0 0.0
        %1290 = vmatpush1.msra.mxu0 0.0
        %1291 = vmatprep.subr.mxu0 0.0
        %1292 = vmatpush1.msra.mxu0 0.0
        %1293 = vmatprep.subr.mxu0 0.0
        %1294 = vmatpush1.msra.mxu0 0.0
        %1295 = vmatprep.subr.mxu0 0.0
        %1296 = vmatpush1.msra.mxu0 0.0
        %1297 = vmatprep.subr.mxu0 0.0
        %1298 = vmatpush1.msra.mxu0 0.0
        %1299 = vmatprep.subr.mxu0 0.0
        %1300 = vmatpush1.msra.mxu0 0.0
        %1301 = vmatprep.subr.mxu0 0.0
        %1302 = vmatpush1.msra.mxu0 0.0
        %1303 = vmatprep.subr.mxu0 0.0
        %1304 = vmatpush1.msra.mxu0 0.0
        %1305 = vmatprep.subr.mxu0 0.0
        %1306 = vmatpush1.msra.mxu0 0.0
        %1307 = vmatprep.subr.mxu0 0.0
        %1308 = vmatpush1.msra.mxu0 0.0
        %1309 = vmatprep.subr.mxu0 0.0
        %1310 = vmatpush1.msra.mxu0 0.0
        %1311 = vmatprep.subr.mxu0 0.0
        %1312 = vmatpush1.msra.mxu0 0.0
        %1313 = vmatprep.subr.mxu0 0.0
        %1314 = vmatpush1.msra.mxu0 0.0
        %1315 = vmatprep.subr.mxu0 0.0
        %1316 = vmatpush1.msra.mxu0 0.0
        %1317 = vmatprep.subr.mxu0 0.0
        %1318 = vmatpush1.msra.mxu0 0.0
        %1319 = vmatprep.mubr.f32.mxu0 0.0
        %1320 = vmatmul.mubr.f32.gmra.mrb[0].mxu0 %v1250
        %v1321 = vpop.f32.mrb[0].mxu0
        %v1322 = vadd.f32 %v1248, %v1321
        %v1323 = vpop.f32.mrb[0].mxu0
        %1324 = vdwg.mxu0
        %v1325 = vsub.f32 0.0, %v1322
        %v1326 = vmul.f32 %v1325, 1.442695
        %v1327 = vpow.pop %v1326
        %v1328 = vadd.f32 %v1327, 1.0
        %v1329 = vrcp.pop %v1328
        %v1330 = vmul.f32 1.0, %v1329
        %v1331 = vld [vmem:[%s330] sm:$0xff]
        %v1332 = vld [vmem:[%s330 + $0x8] sm:$0xff]
        %v1333 = vld [vmem:[%s330 + $0x10] sm:$0xff]
        %v1334 = vld [vmem:[%s330 + $0x18] sm:$0xff]
        %v1335 = vld [vmem:[%s330 + $0x20] sm:$0xff]
        %v1336 = vld [vmem:[%s330 + $0x28] sm:$0xff]
        %v1337 = vld [vmem:[%s330 + $0x30] sm:$0xff]
        %v1338 = vld [vmem:[%s330 + $0x38] sm:$0xff]
        %v1341 = vunpack.c.l.s4 1966171168
        %v1342 = vunpack.c.0.s8 %v1341
        %v1343 = vlaneseq
        %v1344 = vshrl.u32 %v1343, 7
        %v1345 = vsub.s32 %v1342, %v1344
        %v1346 = vrot.slane %v1330, %v1345
        %v1347 = vcombine.high %v1346, %v1346
        %v1349 = vunpack.c.l.s4 1966171168
        %v1350 = vunpack.c.0.s8 %v1349
        %v1351 = vlaneseq
        %v1352 = vshrl.u32 %v1351, 7
        %v1353 = vsub.s32 %v1350, %v1352
        %v1354 = vrot.slane %v1346, %v1353
        %v1356 = vunpack.c.l.s4 1966171168
        %v1357 = vunpack.c.0.s8 %v1356
        %v1358 = vlaneseq
        %v1359 = vshrl.u32 %v1358, 7
        %v1360 = vsub.s32 %v1357, %v1359
        %v1361 = vrot.slane %v1347, %v1360
        %v1362 = vcombine.high %v1354, %v1354
        %v1363 = vcombine.high %v1361, %v1361
        %v1364 = vlaneseq
        %v1365 = vshrl.u32 %v1364, 7
        %v1366 = vsub.s32 0, %v1365
        %v1367 = vrot.slane %v1354, %v1366
        %v1368 = vlaneseq
        %v1369 = vshrl.u32 %v1368, 7
        %v1370 = vsub.s32 0, %v1369
        %v1371 = vrot.slane %v1361, %v1370
        %v1372 = vlaneseq
        %v1373 = vshrl.u32 %v1372, 7
        %v1374 = vsub.s32 0, %v1373
        %v1375 = vrot.slane %v1362, %v1374
        %v1376 = vlaneseq
        %v1377 = vshrl.u32 %v1376, 7
        %v1378 = vsub.s32 0, %v1377
        %v1379 = vrot.slane %v1363, %v1378
        %1380 = vset.pattern.permute.xlu0 0
        %1381 = vperm.xlu0 %1380, %v1367
        %v1382 = vpop.permute.xlu0 %1381
        %1384 = vset.pattern.permute.xlu0 0
        %1385 = vperm.xlu0 %1384, %v1371
        %v1386 = vpop.permute.xlu0 %1385
        %1388 = vset.pattern.permute.xlu0 0
        %1389 = vperm.xlu0 %1388, %v1375
        %v1390 = vpop.permute.xlu0 %1389
        %1392 = vset.pattern.permute.xlu0 0
        %1393 = vperm.xlu0 %1392, %v1379
        %v1394 = vpop.permute.xlu0 %1393
        %v1396 = vmul.f32 %v1331, %v1382
        %v1397 = vmul.f32 %v1332, %v1382
        %v1398 = vmul.f32 %v1333, %v1386
        %v1399 = vmul.f32 %v1334, %v1386
        %v1400 = vmul.f32 %v1335, %v1390
        %v1401 = vmul.f32 %v1336, %v1390
        %v1402 = vmul.f32 %v1337, %v1394
        %v1403 = vmul.f32 %v1338, %v1394
        %1404 = vst.msk [vmem:[%s325] sm:$0xff] %vm534, %v1396
        %1405 = vst.msk [vmem:[%s325 + $0x8] sm:$0xff] %vm534, %v1397
        %1406 = vst.msk [vmem:[%s325 + $0x10] sm:$0xff] %vm534, %v1398
        %1407 = vst.msk [vmem:[%s325 + $0x18] sm:$0xff] %vm534, %v1399
        %1408 = vst.msk [vmem:[%s325 + $0x20] sm:$0xff] %vm534, %v1400
        %1409 = vst.msk [vmem:[%s325 + $0x28] sm:$0xff] %vm534, %v1401
        %1410 = vst.msk [vmem:[%s325 + $0x30] sm:$0xff] %vm534, %v1402
        %1411 = vst.msk [vmem:[%s325 + $0x38] sm:$0xff] %vm534, %v1403
        %s1412 = sand.u32 %s225, 1
        %s1413 = scalar_lea.sflag [#allocation5], %s1412
        %s1414 = sand.u32 %s225, 1
        %s1415 = smul.addr %s1414, 64
        %s1416 = scalar_lea.vmem [#allocation4], %s1415
        // Predicated region
        $region64: #{ca_layer.1} parent=55 // pred_check
          %p1417 = pneg %p235
        $region65: #{ca_layer.1} parent=55 // pred_check_branch
          %1419 = sbr.rel (%p1417) target = $region67
        $region66: #{ca_layer.1} parent=55 // pred_region
          %s1421 = ssub.s32 1024, 1024
          %1422 = vsyncadd %s1413, %s1421
          %s1423 = smul.addr %s23, 8
          %s1424 = smul.addr %s1423, 128
          %s1425 = scalar_lea.hbm %s9, %s1424
          %s1426 = sshll.u32 %s1416, 4
          %s1427 = int_to_ptr.vmem [resolvable:$true] %s1426
          %1432 = dma.vmem_to_hbm [thread:$0]  %s1427, 1024, %s1425, %s1413, 128, 128, 8
        $region67: #{ca_layer.1} parent=55 // pred_fallthru
          _
      $region56: #{ca_layer.1} parent=5 // pred_fallthru
        _
      %p1433 = scmp.le.s32.totalorder 2, %s18
      // Predicated region
      $region68: #{ca_layer.1} parent=5 // pred_check
        %p1434 = pneg %p1433
      $region69: #{ca_layer.1} parent=5 // pred_check_branch
        %1436 = sbr.rel (%p1434) target = $region71
      $region70: #{ca_layer.1} parent=5 // pred_region
        %s1437 = ssub.s32 %s18, 2
        // Predicated region
        $region72: #{ca_layer.1} parent=70 // pred_check
          %p1438 = pneg %p241
        $region73: #{ca_layer.1} parent=70 // pred_check_branch
          %1440 = sbr.rel (%p1438) target = $region75
        $region74: #{ca_layer.1} parent=70 // pred_region
          %s1441 = sand.u32 %s226, 1
          %s1442 = scalar_lea.sflag [#allocation5], %s1441
          %s1443 = sand.u32 %s226, 1
          %s1444 = smul.addr %s1443, 64
          %s1445 = scalar_lea.vmem [#allocation4], %s1444
          %1446 = dma.done %s1442, 1024
        $region75: #{ca_layer.1} parent=70 // pred_fallthru
          _
      $region71: #{ca_layer.1} parent=5 // pred_fallthru
        _
    $region6: #{ca_layer.1} parent=1 // loop_footer
      %s22 = sadd.s32 1, %s18
    $region7: #{ca_layer.1} parent=1 // loop_footer_branch
      %17 = sbr.rel target = $region3
    $region8: #{ca_layer.1} parent=1 // loop_exit
      _
    %1447 = vsyncpa [#allocation5], 1
    %s1448 = scalar_lea.sflag [#allocation5], 1
    %1449 = vsyncpa %s1448, 1

</llo_original>
